<compile_context>
chip_gen: v5e
topology: v5e:2x2
jax: 0.10.0
libtpu: 0.0.40
codegen_flags: <defaults>
</compile_context>

<pallas_src>
import jax
import jax.numpy as jnp
from jax import lax
from jax.experimental import pallas as pl
from jax.experimental.pallas import tpu as pltpu

# Problem sizes (consistent with CBAM(in_channels=16, ratio=8, kernel_size=5, dim=3))
N, C, D, H, W = 2, 16, 8, 8, 8
RATIO, K = 8, 5
CH = C // RATIO            # hidden channels of the shared MLP
S = D * H * W              # 512 -> lane-dense flattened spatial axis
PAD = K // 2
KD_PAD = 8                 # kd groups padded to 8 rows -> each kh block is sublane-aligned


def _roll_lanes(v, k):
    """u[..., i] = v[..., (i + k) % S] via one XLU lane rotate. Wrapped lanes are always
    killed by the caller's per-axis validity mask, so the wrap implements conv zero padding."""
    if k % S == 0:
        return v
    return pltpu.roll(v, (-k) % S, axis=1)


# ---------------- Fused kernel: channel attention + spatial attention + apply ----------------
def cbam_kernel(x_ref, w1_ref, w2_ref, wm_ref, cb_ref, out_ref):
    B = x_ref.shape[0]                                      # 1 (grid over batch) or N (folded)

    # Batch-invariant masks / weights hoisted out of the (unrolled) batch loop.
    lane = lax.broadcasted_iota(jnp.int32, (1, S), 1)       # flat index i = d*64 + h*8 + w
    w_idx = lane & (W - 1)
    h_idx = (lane >> 3) & (H - 1)
    d_idx = lane >> 6
    valid_w = [(w_idx + (kw - PAD) >= 0) & (w_idx + (kw - PAD) < W) for kw in range(K)]
    valid_h = [(h_idx + (kh - PAD) >= 0) & (h_idx + (kh - PAD) < H) for kh in range(K)]
    valid_d = [(d_idx + (kd - PAD) >= 0) & (d_idx + (kd - PAD) < D) for kd in range(K)]
    w1 = w1_ref[...]                                        # (CH, C)
    w2 = w2_ref[...]                                        # (C, CH)
    wm = wm_ref[...]                                        # (K*8, 2K) rows=(kh,kd) cols=(kw,c)
    cb = cb_ref[0]                                          # conv bias scalar (SMEM)

    for b in range(B):
        x = x_ref[b]                                        # (C, S)

        # ---- Channel attention (AdaptiveAvg/MaxPool3d(1) + shared 1x1x1 MLP) ----
        avg_c = jnp.mean(x, axis=1, keepdims=True)          # (C, 1)
        max_c = jnp.max(x, axis=1, keepdims=True)           # (C, 1)
        pooled_pair = jnp.concatenate([avg_c, max_c], axis=1)        # (C, 2): one MLP pass
        h1 = jnp.maximum(jnp.dot(w1, pooled_pair,
                                 preferred_element_type=jnp.float32), 0.0)   # (CH, 2)
        y = jnp.dot(w2, h1, preferred_element_type=jnp.float32)              # (C, 2)
        ca = jax.nn.sigmoid(y[:, 0:1] + y[:, 1:2])          # (C, 1)

        # Channel-wise pooled maps of x1 = ca*x (torch.cat([avg, max]) order).
        # x / x1 are intentionally NOT referenced again until the final store,
        # which reloads x from VMEM (keeps them out of the vreg-heavy conv region).
        x1 = ca * x
        cmean = jnp.mean(x1, axis=0, keepdims=True)         # (1, S)
        cmax = jnp.max(x1, axis=0, keepdims=True)           # (1, S)
        pooled2 = jnp.concatenate([cmean, cmax], axis=0)    # (2, S)

        # ---- Spatial attention: 5x5x5 conv as masked-roll -> matmul -> masked-rolls ----
        # Stage 1: 5 masked w-rolls on the (2, S) pair -> (2K, S), row = kw*2 + c.
        a_mat = jnp.concatenate(
            [jnp.where(valid_w[kw], _roll_lanes(pooled2, kw - PAD), 0.0) for kw in range(K)],
            axis=0)

        # Stage 2: one MXU matmul combines every (c, kw) tap for all (kh, kd).
        b_all = jnp.dot(wm, a_mat, preferred_element_type=jnp.float32)   # (K*8, S)

        # Stage 3: one masked h-roll per kh on an 8-aligned (8, S) block (rows = kd),
        # then 5 masked d-rolls on single rows.
        acc_kd = jnp.zeros((KD_PAD, S), jnp.float32)
        for kh in range(K):
            blk = b_all[kh * KD_PAD:(kh + 1) * KD_PAD, :]                 # (8, S), aligned
            acc_kd = acc_kd + jnp.where(valid_h[kh],
                                        _roll_lanes(blk, (kh - PAD) * W), 0.0)
        acc = jnp.zeros((1, S), jnp.float32)
        for kd in range(K):
            row = acc_kd[kd:kd + 1, :]                                    # (1, S)
            acc = acc + jnp.where(valid_d[kd],
                                  _roll_lanes(row, (kd - PAD) * H * W), 0.0)
        sa = jax.nn.sigmoid(acc + cb)                       # (1, S)

        # Final apply: reload x from VMEM; lane-dense (C, S) store.
        out_ref[b] = (ca * x_ref[b]) * sa


# ---------------- Wrapper ----------------
def _fold_batch_default():
    """Fold the batch into one grid step on single-TensorCore chips (v5e / v6e); keep the
    parallel grid=(N,) elsewhere (v7x 2-TC, megacore) so each core takes one batch."""
    try:
        kind = jax.devices()[0].device_kind.lower()
    except Exception:
        return False
    return any(t in kind for t in ("v5e", "v5 lite", "v5litepod", "v6e", "v6 lite"))


def cbam_pallas(x, w1, w2, conv_w, conv_b, *, fold_batch=None):
    if fold_batch is None:
        fold_batch = _fold_batch_default()

    x_flat = x.reshape(N, C, S).astype(jnp.float32)

    # Conv weights rearranged once at trace time:
    # (1, 2, K, K, K) -> rows (kh, kd padded to 8) x cols (kw, c) = (40, 10).
    w = conv_w[0].astype(jnp.float32)                       # (c, kd, kh, kw)
    wt = jnp.transpose(w, (2, 1, 3, 0))                     # (kh, kd, kw, c)
    wt = jnp.pad(wt, ((0, 0), (0, KD_PAD - K), (0, 0), (0, 0)))   # (kh, 8, kw, c)
    wm = wt.reshape(K * KD_PAD, K * 2)                      # (40, 10)

    bb = N if fold_batch else 1
    grid = (N // bb,)
    sem = ("arbitrary",) if fold_batch else ("parallel",)

    out_flat = pl.pallas_call(
        cbam_kernel,
        out_shape=jax.ShapeDtypeStruct((N, C, S), jnp.float32),
        grid=grid,
        in_specs=[
            pl.BlockSpec((bb, C, S), lambda n: (n, 0, 0)),          # x (per-step batch block)
            pl.BlockSpec((CH, C), lambda n: (0, 0)),                # MLP weight 1
            pl.BlockSpec((C, CH), lambda n: (0, 0)),                # MLP weight 2
            pl.BlockSpec((K * KD_PAD, 2 * K), lambda n: (0, 0)),    # conv weight matrix
            pl.BlockSpec(memory_space=pltpu.MemorySpace.SMEM),      # conv bias (scalar)
        ],
        out_specs=pl.BlockSpec((bb, C, S), lambda n: (n, 0, 0)),
        compiler_params=pltpu.CompilerParams(dimension_semantics=sem),
    )(x_flat, w1.astype(jnp.float32), w2.astype(jnp.float32), wm, conv_b.astype(jnp.float32))
    return out_flat.reshape(N, C, D, H, W)


# ---------------- Pure-JAX reference (for validation) ----------------
def cbam_ref(x, w1, w2, conv_w, conv_b):
    avg = jnp.mean(x, axis=(2, 3, 4))                # (N, C)
    mx = jnp.max(x, axis=(2, 3, 4))                  # (N, C)

    def mlp(v):
        return jnp.maximum(v @ w1.T, 0.0) @ w2.T

    ca = jax.nn.sigmoid(mlp(avg) + mlp(mx))[:, :, None, None, None]
    x1 = ca * x
    cmean = jnp.mean(x1, axis=1, keepdims=True)
    cmax = jnp.max(x1, axis=1, keepdims=True)
    pooled = jnp.concatenate([cmean, cmax], axis=1)
    sa = lax.conv_general_dilated(pooled, conv_w, window_strides=(1, 1, 1),
                                  padding=[(PAD, PAD)] * 3,
                                  dimension_numbers=("NCDHW", "OIDHW", "NCDHW"))
    sa = jax.nn.sigmoid(sa + conv_b.reshape(1, 1, 1, 1, 1))
    return sa * x1


if __name__ == "__main__":
    key = jax.random.PRNGKey(0)
    kx, k1, k2, k3, k4 = jax.random.split(key, 5)

    x = jax.random.normal(kx, (N, C, D, H, W), jnp.float32)
    # Parameters with the PyTorch module's shapes
    w1 = 0.1 * jax.random.normal(k1, (CH, C), jnp.float32)              # Conv3d(C, C//ratio, 1, bias=False)
    w2 = 0.1 * jax.random.normal(k2, (C, CH), jnp.float32)              # Conv3d(C//ratio, C, 1, bias=False)
    conv_w = 0.1 * jax.random.normal(k3, (1, 2, K, K, K), jnp.float32)  # Conv3d(2, 1, 5, padding=2)
    conv_b = 0.1 * jax.random.normal(k4, (1,), jnp.float32)

    out = cbam_pallas(x, w1, w2, conv_w, conv_b)
    out = jax.block_until_ready(out)

    ref = cbam_ref(x, w1, w2, conv_w, conv_b)
    assert out.shape == (N, C, D, H, W)
    err = float(jnp.max(jnp.abs(out - ref)))
    assert jnp.allclose(out, ref, atol=1e-4, rtol=1e-4), err

    print("KERNEL_OK")
</pallas_src>

<mosaic_0001>
module attributes {stable_mosaic.version = 11 : i64} {
  func.func @cbam_kernel(%arg0: i32, %arg1: memref<1x16x512xf32, #tpu.memory_space<vmem>>, %arg2: memref<2x16xf32, #tpu.memory_space<vmem>>, %arg3: memref<16x2xf32, #tpu.memory_space<vmem>>, %arg4: memref<40x10xf32, #tpu.memory_space<vmem>>, %arg5: memref<1xf32, #tpu.memory_space<smem>>, %arg6: memref<1x16x512xf32, #tpu.memory_space<vmem>>) attributes {dimension_semantics = [#tpu.dimension_semantics<parallel>], iteration_bounds = array<i64: 2>, scalar_prefetch = 0 : i64, scratch_operands = 0 : i64, tpu.core_type = #tpu.core_type<tc>, window_params = [{transform_indices = @transform_0, window_bounds = array<i64: 1, 16, 512>}, {pipeline_mode = #tpu.pipeline_mode<synchronous>, transform_indices = @transform_1, window_bounds = array<i64: 2, 16>}, {pipeline_mode = #tpu.pipeline_mode<synchronous>, transform_indices = @transform_2, window_bounds = array<i64: 16, 2>}, {pipeline_mode = #tpu.pipeline_mode<synchronous>, transform_indices = @transform_3, window_bounds = array<i64: 40, 10>}, {transform_indices = @transform_4, window_bounds = array<i64: 1>}, {transform_indices = @transform_5, window_bounds = array<i64: 1, 16, 512>}]} {
    %0 = tpu.iota {dimensions = array<i32: 1>} : vector<1x512xi32>
    %c7_i32 = arith.constant 7 : i32
    %1 = vector.broadcast %c7_i32 : i32 to vector<1x512xi32>
    %2 = arith.andi %0, %1 : vector<1x512xi32>
    %c3_i32 = arith.constant 3 : i32
    %3 = vector.broadcast %c3_i32 : i32 to vector<1x512xi32>
    %4 = arith.shrsi %0, %3 : vector<1x512xi32>
    %c7_i32_0 = arith.constant 7 : i32
    %5 = vector.broadcast %c7_i32_0 : i32 to vector<1x512xi32>
    %6 = arith.andi %4, %5 : vector<1x512xi32>
    %c6_i32 = arith.constant 6 : i32
    %7 = vector.broadcast %c6_i32 : i32 to vector<1x512xi32>
    %8 = arith.shrsi %0, %7 : vector<1x512xi32>
    %c-2_i32 = arith.constant -2 : i32
    %9 = vector.broadcast %c-2_i32 : i32 to vector<1x512xi32>
    %10 = arith.addi %2, %9 : vector<1x512xi32>
    %c0_i32 = arith.constant 0 : i32
    %11 = vector.broadcast %c0_i32 : i32 to vector<1x512xi32>
    %12 = arith.cmpi sge, %10, %11 : vector<1x512xi32>
    %c-2_i32_1 = arith.constant -2 : i32
    %13 = vector.broadcast %c-2_i32_1 : i32 to vector<1x512xi32>
    %14 = arith.addi %2, %13 : vector<1x512xi32>
    %c8_i32 = arith.constant 8 : i32
    %15 = vector.broadcast %c8_i32 : i32 to vector<1x512xi32>
    %16 = arith.cmpi slt, %14, %15 : vector<1x512xi32>
    %17 = arith.andi %12, %16 : vector<1x512xi1>
    %c-1_i32 = arith.constant -1 : i32
    %18 = vector.broadcast %c-1_i32 : i32 to vector<1x512xi32>
    %19 = arith.addi %2, %18 : vector<1x512xi32>
    %c0_i32_2 = arith.constant 0 : i32
    %20 = vector.broadcast %c0_i32_2 : i32 to vector<1x512xi32>
    %21 = arith.cmpi sge, %19, %20 : vector<1x512xi32>
    %c-1_i32_3 = arith.constant -1 : i32
    %22 = vector.broadcast %c-1_i32_3 : i32 to vector<1x512xi32>
    %23 = arith.addi %2, %22 : vector<1x512xi32>
    %c8_i32_4 = arith.constant 8 : i32
    %24 = vector.broadcast %c8_i32_4 : i32 to vector<1x512xi32>
    %25 = arith.cmpi slt, %23, %24 : vector<1x512xi32>
    %26 = arith.andi %21, %25 : vector<1x512xi1>
    %c0_i32_5 = arith.constant 0 : i32
    %27 = vector.broadcast %c0_i32_5 : i32 to vector<1x512xi32>
    %28 = arith.addi %2, %27 : vector<1x512xi32>
    %c0_i32_6 = arith.constant 0 : i32
    %29 = vector.broadcast %c0_i32_6 : i32 to vector<1x512xi32>
    %30 = arith.cmpi sge, %28, %29 : vector<1x512xi32>
    %c0_i32_7 = arith.constant 0 : i32
    %31 = vector.broadcast %c0_i32_7 : i32 to vector<1x512xi32>
    %32 = arith.addi %2, %31 : vector<1x512xi32>
    %c8_i32_8 = arith.constant 8 : i32
    %33 = vector.broadcast %c8_i32_8 : i32 to vector<1x512xi32>
    %34 = arith.cmpi slt, %32, %33 : vector<1x512xi32>
    %35 = arith.andi %30, %34 : vector<1x512xi1>
    %c1_i32 = arith.constant 1 : i32
    %36 = vector.broadcast %c1_i32 : i32 to vector<1x512xi32>
    %37 = arith.addi %2, %36 : vector<1x512xi32>
    %c0_i32_9 = arith.constant 0 : i32
    %38 = vector.broadcast %c0_i32_9 : i32 to vector<1x512xi32>
    %39 = arith.cmpi sge, %37, %38 : vector<1x512xi32>
    %c1_i32_10 = arith.constant 1 : i32
    %40 = vector.broadcast %c1_i32_10 : i32 to vector<1x512xi32>
    %41 = arith.addi %2, %40 : vector<1x512xi32>
    %c8_i32_11 = arith.constant 8 : i32
    %42 = vector.broadcast %c8_i32_11 : i32 to vector<1x512xi32>
    %43 = arith.cmpi slt, %41, %42 : vector<1x512xi32>
    %44 = arith.andi %39, %43 : vector<1x512xi1>
    %c2_i32 = arith.constant 2 : i32
    %45 = vector.broadcast %c2_i32 : i32 to vector<1x512xi32>
    %46 = arith.addi %2, %45 : vector<1x512xi32>
    %c0_i32_12 = arith.constant 0 : i32
    %47 = vector.broadcast %c0_i32_12 : i32 to vector<1x512xi32>
    %48 = arith.cmpi sge, %46, %47 : vector<1x512xi32>
    %c2_i32_13 = arith.constant 2 : i32
    %49 = vector.broadcast %c2_i32_13 : i32 to vector<1x512xi32>
    %50 = arith.addi %2, %49 : vector<1x512xi32>
    %c8_i32_14 = arith.constant 8 : i32
    %51 = vector.broadcast %c8_i32_14 : i32 to vector<1x512xi32>
    %52 = arith.cmpi slt, %50, %51 : vector<1x512xi32>
    %53 = arith.andi %48, %52 : vector<1x512xi1>
    %c-2_i32_15 = arith.constant -2 : i32
    %54 = vector.broadcast %c-2_i32_15 : i32 to vector<1x512xi32>
    %55 = arith.addi %6, %54 : vector<1x512xi32>
    %c0_i32_16 = arith.constant 0 : i32
    %56 = vector.broadcast %c0_i32_16 : i32 to vector<1x512xi32>
    %57 = arith.cmpi sge, %55, %56 : vector<1x512xi32>
    %c-2_i32_17 = arith.constant -2 : i32
    %58 = vector.broadcast %c-2_i32_17 : i32 to vector<1x512xi32>
    %59 = arith.addi %6, %58 : vector<1x512xi32>
    %c8_i32_18 = arith.constant 8 : i32
    %60 = vector.broadcast %c8_i32_18 : i32 to vector<1x512xi32>
    %61 = arith.cmpi slt, %59, %60 : vector<1x512xi32>
    %62 = arith.andi %57, %61 : vector<1x512xi1>
    %c-1_i32_19 = arith.constant -1 : i32
    %63 = vector.broadcast %c-1_i32_19 : i32 to vector<1x512xi32>
    %64 = arith.addi %6, %63 : vector<1x512xi32>
    %c0_i32_20 = arith.constant 0 : i32
    %65 = vector.broadcast %c0_i32_20 : i32 to vector<1x512xi32>
    %66 = arith.cmpi sge, %64, %65 : vector<1x512xi32>
    %c-1_i32_21 = arith.constant -1 : i32
    %67 = vector.broadcast %c-1_i32_21 : i32 to vector<1x512xi32>
    %68 = arith.addi %6, %67 : vector<1x512xi32>
    %c8_i32_22 = arith.constant 8 : i32
    %69 = vector.broadcast %c8_i32_22 : i32 to vector<1x512xi32>
    %70 = arith.cmpi slt, %68, %69 : vector<1x512xi32>
    %71 = arith.andi %66, %70 : vector<1x512xi1>
    %c0_i32_23 = arith.constant 0 : i32
    %72 = vector.broadcast %c0_i32_23 : i32 to vector<1x512xi32>
    %73 = arith.addi %6, %72 : vector<1x512xi32>
    %c0_i32_24 = arith.constant 0 : i32
    %74 = vector.broadcast %c0_i32_24 : i32 to vector<1x512xi32>
    %75 = arith.cmpi sge, %73, %74 : vector<1x512xi32>
    %c0_i32_25 = arith.constant 0 : i32
    %76 = vector.broadcast %c0_i32_25 : i32 to vector<1x512xi32>
    %77 = arith.addi %6, %76 : vector<1x512xi32>
    %c8_i32_26 = arith.constant 8 : i32
    %78 = vector.broadcast %c8_i32_26 : i32 to vector<1x512xi32>
    %79 = arith.cmpi slt, %77, %78 : vector<1x512xi32>
    %80 = arith.andi %75, %79 : vector<1x512xi1>
    %c1_i32_27 = arith.constant 1 : i32
    %81 = vector.broadcast %c1_i32_27 : i32 to vector<1x512xi32>
    %82 = arith.addi %6, %81 : vector<1x512xi32>
    %c0_i32_28 = arith.constant 0 : i32
    %83 = vector.broadcast %c0_i32_28 : i32 to vector<1x512xi32>
    %84 = arith.cmpi sge, %82, %83 : vector<1x512xi32>
    %c1_i32_29 = arith.constant 1 : i32
    %85 = vector.broadcast %c1_i32_29 : i32 to vector<1x512xi32>
    %86 = arith.addi %6, %85 : vector<1x512xi32>
    %c8_i32_30 = arith.constant 8 : i32
    %87 = vector.broadcast %c8_i32_30 : i32 to vector<1x512xi32>
    %88 = arith.cmpi slt, %86, %87 : vector<1x512xi32>
    %89 = arith.andi %84, %88 : vector<1x512xi1>
    %c2_i32_31 = arith.constant 2 : i32
    %90 = vector.broadcast %c2_i32_31 : i32 to vector<1x512xi32>
    %91 = arith.addi %6, %90 : vector<1x512xi32>
    %c0_i32_32 = arith.constant 0 : i32
    %92 = vector.broadcast %c0_i32_32 : i32 to vector<1x512xi32>
    %93 = arith.cmpi sge, %91, %92 : vector<1x512xi32>
    %c2_i32_33 = arith.constant 2 : i32
    %94 = vector.broadcast %c2_i32_33 : i32 to vector<1x512xi32>
    %95 = arith.addi %6, %94 : vector<1x512xi32>
    %c8_i32_34 = arith.constant 8 : i32
    %96 = vector.broadcast %c8_i32_34 : i32 to vector<1x512xi32>
    %97 = arith.cmpi slt, %95, %96 : vector<1x512xi32>
    %98 = arith.andi %93, %97 : vector<1x512xi1>
    %c-2_i32_35 = arith.constant -2 : i32
    %99 = vector.broadcast %c-2_i32_35 : i32 to vector<1x512xi32>
    %100 = arith.addi %8, %99 : vector<1x512xi32>
    %c0_i32_36 = arith.constant 0 : i32
    %101 = vector.broadcast %c0_i32_36 : i32 to vector<1x512xi32>
    %102 = arith.cmpi sge, %100, %101 : vector<1x512xi32>
    %c-2_i32_37 = arith.constant -2 : i32
    %103 = vector.broadcast %c-2_i32_37 : i32 to vector<1x512xi32>
    %104 = arith.addi %8, %103 : vector<1x512xi32>
    %c8_i32_38 = arith.constant 8 : i32
    %105 = vector.broadcast %c8_i32_38 : i32 to vector<1x512xi32>
    %106 = arith.cmpi slt, %104, %105 : vector<1x512xi32>
    %107 = arith.andi %102, %106 : vector<1x512xi1>
    %c-1_i32_39 = arith.constant -1 : i32
    %108 = vector.broadcast %c-1_i32_39 : i32 to vector<1x512xi32>
    %109 = arith.addi %8, %108 : vector<1x512xi32>
    %c0_i32_40 = arith.constant 0 : i32
    %110 = vector.broadcast %c0_i32_40 : i32 to vector<1x512xi32>
    %111 = arith.cmpi sge, %109, %110 : vector<1x512xi32>
    %c-1_i32_41 = arith.constant -1 : i32
    %112 = vector.broadcast %c-1_i32_41 : i32 to vector<1x512xi32>
    %113 = arith.addi %8, %112 : vector<1x512xi32>
    %c8_i32_42 = arith.constant 8 : i32
    %114 = vector.broadcast %c8_i32_42 : i32 to vector<1x512xi32>
    %115 = arith.cmpi slt, %113, %114 : vector<1x512xi32>
    %116 = arith.andi %111, %115 : vector<1x512xi1>
    %c0_i32_43 = arith.constant 0 : i32
    %117 = vector.broadcast %c0_i32_43 : i32 to vector<1x512xi32>
    %118 = arith.addi %8, %117 : vector<1x512xi32>
    %c0_i32_44 = arith.constant 0 : i32
    %119 = vector.broadcast %c0_i32_44 : i32 to vector<1x512xi32>
    %120 = arith.cmpi sge, %118, %119 : vector<1x512xi32>
    %c0_i32_45 = arith.constant 0 : i32
    %121 = vector.broadcast %c0_i32_45 : i32 to vector<1x512xi32>
    %122 = arith.addi %8, %121 : vector<1x512xi32>
    %c8_i32_46 = arith.constant 8 : i32
    %123 = vector.broadcast %c8_i32_46 : i32 to vector<1x512xi32>
    %124 = arith.cmpi slt, %122, %123 : vector<1x512xi32>
    %125 = arith.andi %120, %124 : vector<1x512xi1>
    %c1_i32_47 = arith.constant 1 : i32
    %126 = vector.broadcast %c1_i32_47 : i32 to vector<1x512xi32>
    %127 = arith.addi %8, %126 : vector<1x512xi32>
    %c0_i32_48 = arith.constant 0 : i32
    %128 = vector.broadcast %c0_i32_48 : i32 to vector<1x512xi32>
    %129 = arith.cmpi sge, %127, %128 : vector<1x512xi32>
    %c1_i32_49 = arith.constant 1 : i32
    %130 = vector.broadcast %c1_i32_49 : i32 to vector<1x512xi32>
    %131 = arith.addi %8, %130 : vector<1x512xi32>
    %c8_i32_50 = arith.constant 8 : i32
    %132 = vector.broadcast %c8_i32_50 : i32 to vector<1x512xi32>
    %133 = arith.cmpi slt, %131, %132 : vector<1x512xi32>
    %134 = arith.andi %129, %133 : vector<1x512xi1>
    %c2_i32_51 = arith.constant 2 : i32
    %135 = vector.broadcast %c2_i32_51 : i32 to vector<1x512xi32>
    %136 = arith.addi %8, %135 : vector<1x512xi32>
    %c0_i32_52 = arith.constant 0 : i32
    %137 = vector.broadcast %c0_i32_52 : i32 to vector<1x512xi32>
    %138 = arith.cmpi sge, %136, %137 : vector<1x512xi32>
    %c2_i32_53 = arith.constant 2 : i32
    %139 = vector.broadcast %c2_i32_53 : i32 to vector<1x512xi32>
    %140 = arith.addi %8, %139 : vector<1x512xi32>
    %c8_i32_54 = arith.constant 8 : i32
    %141 = vector.broadcast %c8_i32_54 : i32 to vector<1x512xi32>
    %142 = arith.cmpi slt, %140, %141 : vector<1x512xi32>
    %143 = arith.andi %138, %142 : vector<1x512xi1>
    %c0 = arith.constant 0 : index
    %c0_55 = arith.constant 0 : index
    %144 = vector.load %arg2[%c0, %c0_55] : memref<2x16xf32, #tpu.memory_space<vmem>>, vector<2x16xf32>
    %c0_56 = arith.constant 0 : index
    %c0_57 = arith.constant 0 : index
    %145 = vector.load %arg3[%c0_56, %c0_57] : memref<16x2xf32, #tpu.memory_space<vmem>>, vector<16x2xf32>
    %c0_58 = arith.constant 0 : index
    %c0_59 = arith.constant 0 : index
    %146 = vector.load %arg4[%c0_58, %c0_59] : memref<40x10xf32, #tpu.memory_space<vmem>>, vector<40x10xf32>
    %c0_60 = arith.constant 0 : index
    %147 = memref.load %arg5[%c0_60] : memref<1xf32, #tpu.memory_space<smem>>
    %c0_61 = arith.constant 0 : index
    %c0_62 = arith.constant 0 : index
    %c0_63 = arith.constant 0 : index
    %148 = vector.load %arg1[%c0_61, %c0_62, %c0_63] : memref<1x16x512xf32, #tpu.memory_space<vmem>>, vector<1x16x512xf32>
    %149 = vector.shape_cast %148 : vector<1x16x512xf32> to vector<16x512xf32>
    %cst = arith.constant dense<0.000000e+00> : vector<16xf32>
    %150 = vector.multi_reduction <add>, %149, %cst [1] : vector<16x512xf32> to vector<16xf32>
    %151 = vector.shape_cast %150 : vector<16xf32> to vector<16x1xf32>
    %cst_64 = arith.constant 5.120000e+02 : f32
    %152 = vector.broadcast %cst_64 : f32 to vector<16x1xf32>
    %153 = arith.divf %151, %152 : vector<16x1xf32>
    %cst_65 = arith.constant dense<0xFF800000> : vector<16xf32>
    %154 = vector.multi_reduction <maximumf>, %149, %cst_65 [1] : vector<16x512xf32> to vector<16xf32>
    %155 = vector.shape_cast %154 : vector<16xf32> to vector<16x1xf32>
    %156 = tpu.concatenate %153, %155 in 1 : vector<16x1xf32>, vector<16x1xf32> -> vector<16x2xf32>
    %cst_66 = arith.constant dense<0.000000e+00> : vector<2x2xf32>
    %157 = tpu.matmul %144, %156, %cst_66 {dimension_numbers = #tpu.dot_dimension_numbers<[1], [0], [0], [1], [0, 0, 1, 1], [], []>} : vector<2x16xf32>, vector<16x2xf32>, vector<2x2xf32> -> vector<2x2xf32>
    %cst_67 = arith.constant 0.000000e+00 : f32
    %158 = vector.broadcast %cst_67 : f32 to vector<2x2xf32>
    %159 = arith.maximumf %157, %158 : vector<2x2xf32>
    %cst_68 = arith.constant dense<0.000000e+00> : vector<16x2xf32>
    %160 = tpu.matmul %145, %159, %cst_68 {dimension_numbers = #tpu.dot_dimension_numbers<[1], [0], [0], [1], [0, 0, 1, 1], [], []>} : vector<16x2xf32>, vector<2x2xf32>, vector<16x2xf32> -> vector<16x2xf32>
    %161 = vector.extract_strided_slice %160 {offsets = [0, 0], sizes = [16, 1], strides = [1, 1]} : vector<16x2xf32> to vector<16x1xf32>
    %162 = vector.extract_strided_slice %160 {offsets = [0, 1], sizes = [16, 1], strides = [1, 1]} : vector<16x2xf32> to vector<16x1xf32>
    %163 = arith.addf %161, %162 : vector<16x1xf32>
    %164 = arith.negf %163 : vector<16x1xf32>
    %165 = math.exp %164 : vector<16x1xf32>
    %cst_69 = arith.constant 1.000000e+00 : f32
    %166 = vector.broadcast %cst_69 : f32 to vector<16x1xf32>
    %167 = arith.addf %166, %165 : vector<16x1xf32>
    %168 = arith.divf %166, %167 : vector<16x1xf32>
    %169 = vector.broadcast %168 : vector<16x1xf32> to vector<16x512xf32>
    %170 = arith.mulf %169, %149 : vector<16x512xf32>
    %cst_70 = arith.constant dense<0.000000e+00> : vector<512xf32>
    %171 = vector.multi_reduction <add>, %170, %cst_70 [0] : vector<16x512xf32> to vector<512xf32>
    %172 = vector.shape_cast %171 : vector<512xf32> to vector<1x512xf32>
    %cst_71 = arith.constant 1.600000e+01 : f32
    %173 = vector.broadcast %cst_71 : f32 to vector<1x512xf32>
    %174 = arith.divf %172, %173 : vector<1x512xf32>
    %cst_72 = arith.constant dense<0xFF800000> : vector<512xf32>
    %175 = vector.multi_reduction <maximumf>, %170, %cst_72 [0] : vector<16x512xf32> to vector<512xf32>
    %176 = vector.shape_cast %175 : vector<512xf32> to vector<1x512xf32>
    %177 = tpu.concatenate %174, %176 in 0 : vector<1x512xf32>, vector<1x512xf32> -> vector<2x512xf32>
    %c2_i32_73 = arith.constant 2 : i32
    %178 = tpu.dynamic_rotate %177 by %c2_i32_73 dim 1 : vector<2x512xf32>, i32 -> vector<2x512xf32>
    %cst_74 = arith.constant 0.000000e+00 : f32
    %179 = vector.shape_cast %17 : vector<1x512xi1> to vector<1x512xi1>
    %180 = vector.broadcast %179 : vector<1x512xi1> to vector<2x512xi1>
    %181 = vector.broadcast %cst_74 : f32 to vector<2x512xf32>
    %182 = arith.select %180, %178, %181 : vector<2x512xi1>, vector<2x512xf32>
    %c1_i32_75 = arith.constant 1 : i32
    %183 = tpu.dynamic_rotate %177 by %c1_i32_75 dim 1 : vector<2x512xf32>, i32 -> vector<2x512xf32>
    %cst_76 = arith.constant 0.000000e+00 : f32
    %184 = vector.shape_cast %26 : vector<1x512xi1> to vector<1x512xi1>
    %185 = vector.broadcast %184 : vector<1x512xi1> to vector<2x512xi1>
    %186 = vector.broadcast %cst_76 : f32 to vector<2x512xf32>
    %187 = arith.select %185, %183, %186 : vector<2x512xi1>, vector<2x512xf32>
    %cst_77 = arith.constant 0.000000e+00 : f32
    %188 = vector.shape_cast %35 : vector<1x512xi1> to vector<1x512xi1>
    %189 = vector.broadcast %188 : vector<1x512xi1> to vector<2x512xi1>
    %190 = vector.broadcast %cst_77 : f32 to vector<2x512xf32>
    %191 = arith.select %189, %177, %190 : vector<2x512xi1>, vector<2x512xf32>
    %c511_i32 = arith.constant 511 : i32
    %192 = tpu.dynamic_rotate %177 by %c511_i32 dim 1 : vector<2x512xf32>, i32 -> vector<2x512xf32>
    %cst_78 = arith.constant 0.000000e+00 : f32
    %193 = vector.shape_cast %44 : vector<1x512xi1> to vector<1x512xi1>
    %194 = vector.broadcast %193 : vector<1x512xi1> to vector<2x512xi1>
    %195 = vector.broadcast %cst_78 : f32 to vector<2x512xf32>
    %196 = arith.select %194, %192, %195 : vector<2x512xi1>, vector<2x512xf32>
    %c510_i32 = arith.constant 510 : i32
    %197 = tpu.dynamic_rotate %177 by %c510_i32 dim 1 : vector<2x512xf32>, i32 -> vector<2x512xf32>
    %cst_79 = arith.constant 0.000000e+00 : f32
    %198 = vector.shape_cast %53 : vector<1x512xi1> to vector<1x512xi1>
    %199 = vector.broadcast %198 : vector<1x512xi1> to vector<2x512xi1>
    %200 = vector.broadcast %cst_79 : f32 to vector<2x512xf32>
    %201 = arith.select %199, %197, %200 : vector<2x512xi1>, vector<2x512xf32>
    %202 = tpu.concatenate %182, %187, %191, %196, %201 in 0 : vector<2x512xf32>, vector<2x512xf32>, vector<2x512xf32>, vector<2x512xf32>, vector<2x512xf32> -> vector<10x512xf32>
    %cst_80 = arith.constant dense<0.000000e+00> : vector<40x512xf32>
    %203 = tpu.matmul %146, %202, %cst_80 {dimension_numbers = #tpu.dot_dimension_numbers<[1], [0], [0], [1], [0, 0, 1, 1], [], []>} : vector<40x10xf32>, vector<10x512xf32>, vector<40x512xf32> -> vector<40x512xf32>
    %cst_81 = arith.constant 0.000000e+00 : f32
    %204 = vector.broadcast %cst_81 : f32 to vector<8x512xf32>
    %205 = vector.extract_strided_slice %203 {offsets = [0, 0], sizes = [8, 512], strides = [1, 1]} : vector<40x512xf32> to vector<8x512xf32>
    %c16_i32 = arith.constant 16 : i32
    %206 = tpu.dynamic_rotate %205 by %c16_i32 dim 1 : vector<8x512xf32>, i32 -> vector<8x512xf32>
    %cst_82 = arith.constant 0.000000e+00 : f32
    %207 = vector.shape_cast %62 : vector<1x512xi1> to vector<1x512xi1>
    %208 = vector.broadcast %207 : vector<1x512xi1> to vector<8x512xi1>
    %209 = vector.broadcast %cst_82 : f32 to vector<8x512xf32>
    %210 = arith.select %208, %206, %209 : vector<8x512xi1>, vector<8x512xf32>
    %211 = arith.addf %204, %210 : vector<8x512xf32>
    %212 = vector.extract_strided_slice %203 {offsets = [8, 0], sizes = [8, 512], strides = [1, 1]} : vector<40x512xf32> to vector<8x512xf32>
    %c8_i32_83 = arith.constant 8 : i32
    %213 = tpu.dynamic_rotate %212 by %c8_i32_83 dim 1 : vector<8x512xf32>, i32 -> vector<8x512xf32>
    %cst_84 = arith.constant 0.000000e+00 : f32
    %214 = vector.shape_cast %71 : vector<1x512xi1> to vector<1x512xi1>
    %215 = vector.broadcast %214 : vector<1x512xi1> to vector<8x512xi1>
    %216 = vector.broadcast %cst_84 : f32 to vector<8x512xf32>
    %217 = arith.select %215, %213, %216 : vector<8x512xi1>, vector<8x512xf32>
    %218 = arith.addf %211, %217 : vector<8x512xf32>
    %219 = vector.extract_strided_slice %203 {offsets = [16, 0], sizes = [8, 512], strides = [1, 1]} : vector<40x512xf32> to vector<8x512xf32>
    %cst_85 = arith.constant 0.000000e+00 : f32
    %220 = vector.shape_cast %80 : vector<1x512xi1> to vector<1x512xi1>
    %221 = vector.broadcast %220 : vector<1x512xi1> to vector<8x512xi1>
    %222 = vector.broadcast %cst_85 : f32 to vector<8x512xf32>
    %223 = arith.select %221, %219, %222 : vector<8x512xi1>, vector<8x512xf32>
    %224 = arith.addf %218, %223 : vector<8x512xf32>
    %225 = vector.extract_strided_slice %203 {offsets = [24, 0], sizes = [8, 512], strides = [1, 1]} : vector<40x512xf32> to vector<8x512xf32>
    %c504_i32 = arith.constant 504 : i32
    %226 = tpu.dynamic_rotate %225 by %c504_i32 dim 1 : vector<8x512xf32>, i32 -> vector<8x512xf32>
    %cst_86 = arith.constant 0.000000e+00 : f32
    %227 = vector.shape_cast %89 : vector<1x512xi1> to vector<1x512xi1>
    %228 = vector.broadcast %227 : vector<1x512xi1> to vector<8x512xi1>
    %229 = vector.broadcast %cst_86 : f32 to vector<8x512xf32>
    %230 = arith.select %228, %226, %229 : vector<8x512xi1>, vector<8x512xf32>
    %231 = arith.addf %224, %230 : vector<8x512xf32>
    %232 = vector.extract_strided_slice %203 {offsets = [32, 0], sizes = [8, 512], strides = [1, 1]} : vector<40x512xf32> to vector<8x512xf32>
    %c496_i32 = arith.constant 496 : i32
    %233 = tpu.dynamic_rotate %232 by %c496_i32 dim 1 : vector<8x512xf32>, i32 -> vector<8x512xf32>
    %cst_87 = arith.constant 0.000000e+00 : f32
    %234 = vector.shape_cast %98 : vector<1x512xi1> to vector<1x512xi1>
    %235 = vector.broadcast %234 : vector<1x512xi1> to vector<8x512xi1>
    %236 = vector.broadcast %cst_87 : f32 to vector<8x512xf32>
    %237 = arith.select %235, %233, %236 : vector<8x512xi1>, vector<8x512xf32>
    %238 = arith.addf %231, %237 : vector<8x512xf32>
    %cst_88 = arith.constant 0.000000e+00 : f32
    %239 = vector.broadcast %cst_88 : f32 to vector<1x512xf32>
    %240 = vector.extract_strided_slice %238 {offsets = [0, 0], sizes = [1, 512], strides = [1, 1]} : vector<8x512xf32> to vector<1x512xf32>
    %c128_i32 = arith.constant 128 : i32
    %241 = tpu.dynamic_rotate %240 by %c128_i32 dim 1 : vector<1x512xf32>, i32 -> vector<1x512xf32>
    %cst_89 = arith.constant 0.000000e+00 : f32
    %242 = vector.broadcast %cst_89 : f32 to vector<1x512xf32>
    %243 = arith.select %107, %241, %242 : vector<1x512xi1>, vector<1x512xf32>
    %244 = arith.addf %239, %243 : vector<1x512xf32>
    %245 = vector.extract_strided_slice %238 {offsets = [1, 0], sizes = [1, 512], strides = [1, 1]} : vector<8x512xf32> to vector<1x512xf32>
    %c64_i32 = arith.constant 64 : i32
    %246 = tpu.dynamic_rotate %245 by %c64_i32 dim 1 : vector<1x512xf32>, i32 -> vector<1x512xf32>
    %cst_90 = arith.constant 0.000000e+00 : f32
    %247 = vector.broadcast %cst_90 : f32 to vector<1x512xf32>
    %248 = arith.select %116, %246, %247 : vector<1x512xi1>, vector<1x512xf32>
    %249 = arith.addf %244, %248 : vector<1x512xf32>
    %250 = vector.extract_strided_slice %238 {offsets = [2, 0], sizes = [1, 512], strides = [1, 1]} : vector<8x512xf32> to vector<1x512xf32>
    %cst_91 = arith.constant 0.000000e+00 : f32
    %251 = vector.broadcast %cst_91 : f32 to vector<1x512xf32>
    %252 = arith.select %125, %250, %251 : vector<1x512xi1>, vector<1x512xf32>
    %253 = arith.addf %249, %252 : vector<1x512xf32>
    %254 = vector.extract_strided_slice %238 {offsets = [3, 0], sizes = [1, 512], strides = [1, 1]} : vector<8x512xf32> to vector<1x512xf32>
    %c448_i32 = arith.constant 448 : i32
    %255 = tpu.dynamic_rotate %254 by %c448_i32 dim 1 : vector<1x512xf32>, i32 -> vector<1x512xf32>
    %cst_92 = arith.constant 0.000000e+00 : f32
    %256 = vector.broadcast %cst_92 : f32 to vector<1x512xf32>
    %257 = arith.select %134, %255, %256 : vector<1x512xi1>, vector<1x512xf32>
    %258 = arith.addf %253, %257 : vector<1x512xf32>
    %259 = vector.extract_strided_slice %238 {offsets = [4, 0], sizes = [1, 512], strides = [1, 1]} : vector<8x512xf32> to vector<1x512xf32>
    %c384_i32 = arith.constant 384 : i32
    %260 = tpu.dynamic_rotate %259 by %c384_i32 dim 1 : vector<1x512xf32>, i32 -> vector<1x512xf32>
    %cst_93 = arith.constant 0.000000e+00 : f32
    %261 = vector.broadcast %cst_93 : f32 to vector<1x512xf32>
    %262 = arith.select %143, %260, %261 : vector<1x512xi1>, vector<1x512xf32>
    %263 = arith.addf %258, %262 : vector<1x512xf32>
    %264 = vector.broadcast %147 : f32 to vector<1x512xf32>
    %265 = arith.addf %263, %264 : vector<1x512xf32>
    %266 = arith.negf %265 : vector<1x512xf32>
    %267 = math.exp %266 : vector<1x512xf32>
    %cst_94 = arith.constant 1.000000e+00 : f32
    %268 = vector.broadcast %cst_94 : f32 to vector<1x512xf32>
    %269 = arith.addf %268, %267 : vector<1x512xf32>
    %270 = arith.divf %268, %269 : vector<1x512xf32>
    %c0_95 = arith.constant 0 : index
    %c0_96 = arith.constant 0 : index
    %c0_97 = arith.constant 0 : index
    %271 = vector.load %arg1[%c0_95, %c0_96, %c0_97] : memref<1x16x512xf32, #tpu.memory_space<vmem>>, vector<1x16x512xf32>
    %272 = vector.shape_cast %271 : vector<1x16x512xf32> to vector<16x512xf32>
    %273 = vector.broadcast %168 : vector<16x1xf32> to vector<16x512xf32>
    %274 = arith.mulf %273, %272 : vector<16x512xf32>
    %275 = vector.broadcast %270 : vector<1x512xf32> to vector<16x512xf32>
    %276 = arith.mulf %274, %275 : vector<16x512xf32>
    %c0_98 = arith.constant 0 : index
    %c0_99 = arith.constant 0 : index
    %c0_100 = arith.constant 0 : index
    %277 = vector.load %arg6[%c0_98, %c0_99, %c0_100] : memref<1x16x512xf32, #tpu.memory_space<vmem>>, vector<1x16x512xf32>
    %278 = vector.shape_cast %277 : vector<1x16x512xf32> to vector<16x512xf32>
    %279 = vector.shape_cast %276 : vector<16x512xf32> to vector<1x16x512xf32>
    tpu.vector_store %arg6[%c0_98, %c0_99, %c0_100], %279 {strides = array<i32>} : memref<1x16x512xf32, #tpu.memory_space<vmem>>, vector<1x16x512xf32>,
    return
  }
  func.func @transform_0(%arg0: i32) -> (i32, i32, i32) {
    %c0_i32 = arith.constant 0 : i32
    %c0_i32_0 = arith.constant 0 : i32
    %c0_i32_1 = arith.constant 0 : i32
    return %arg0, %c0_i32, %c0_i32_0 : i32, i32, i32
  }
  func.func @transform_1(%arg0: i32) -> (i32, i32) {
    %c0_i32 = arith.constant 0 : i32
    %c0_i32_0 = arith.constant 0 : i32
    %c0_i32_1 = arith.constant 0 : i32
    return %c0_i32, %c0_i32_0 : i32, i32
  }
  func.func @transform_2(%arg0: i32) -> (i32, i32) {
    %c0_i32 = arith.constant 0 : i32
    %c0_i32_0 = arith.constant 0 : i32
    %c0_i32_1 = arith.constant 0 : i32
    return %c0_i32, %c0_i32_0 : i32, i32
  }
  func.func @transform_3(%arg0: i32) -> (i32, i32) {
    %c0_i32 = arith.constant 0 : i32
    %c0_i32_0 = arith.constant 0 : i32
    %c0_i32_1 = arith.constant 0 : i32
    return %c0_i32, %c0_i32_0 : i32, i32
  }
  func.func @transform_4(%arg0: i32) -> i32 {
    %c0_i32 = arith.constant 0 : i32
    %c0_i32_0 = arith.constant 0 : i32
    return %c0_i32 : i32
  }
  func.func @transform_5(%arg0: i32) -> (i32, i32, i32) {
    %c0_i32 = arith.constant 0 : i32
    %c0_i32_0 = arith.constant 0 : i32
    %c0_i32_1 = arith.constant 0 : i32
    return %arg0, %c0_i32, %c0_i32_0 : i32, i32, i32
  }
}

</mosaic_0001>

<llo_original>
// kernel: tpu_custom_call.1
$region0: #{tpu_custom_call.1}
  #allocation0 [shape = 'u32[]', space=smem, size = 0x4, offset = 0x4, fixed_abs, tag = 'smem constant byte address 0x4 - core index']
  #allocation1 [shape = 'u32[72,128]{1,0:T(1,128)}', space=vmem, size = 0x9000, scoped, tag = 'internal scratch']
  #allocation2 [shape = 'f32[1]{0:T(128)S(6)}', space=smem, size = 0x200, scoped, tag = 'scoped memory for tpu_custom_call.1']
  %s0 = inlined_call_operand.hbm [shape: f32[2,16,512], index: 0, kind: input, shape index: {}]
  %s1 = inlined_call_operand.vmem [shape: f32[2,16], index: 1, kind: input, shape index: {}]
  %s2 = inlined_call_operand.vmem [shape: f32[16,2], index: 2, kind: input, shape index: {}]
  %s3 = inlined_call_operand.vmem [shape: f32[40,10], index: 3, kind: input, shape index: {}]
  %s4 = inlined_call_operand.<no memory space> [shape: f32[1], index: 4, kind: input, shape index: {}]
  %s5 = inlined_call_operand.hbm [shape: f32[2,16,512], index: 5, kind: output, shape index: {}]
  %s6 = sld [smem:[#allocation0]]
  $region57: #{tpu_custom_call.1} parent=0
    _
  %s8 = ssub.s32 1, %s6
  %s9 = scalar_select 0, %s8, %s6
  %10 = sst [smem:[#allocation2]] %s4
  $region1: #{tpu_custom_call.1} parent=0
    #allocation3 [shape = 'u8[65536]{0}', space=vmem, size = 0x10000, scoped, tag = 'input window, operand 0']
    #allocation4 [shape = 's32[2]{0}', space=sflag, size = 0x8, scoped, tag = 'scoped memory for tpu_custom_call.1']
    #allocation5 [shape = 's32[2]{0}', space=sflag, size = 0x8, scoped, tag = 'scoped memory for tpu_custom_call.1']
    #allocation6 [shape = 'u8[65536]{0}', space=vmem, size = 0x10000, scoped, tag = 'output window, operand 0']
    %11 = vsyncpa [#allocation4], 0
    %s12 = scalar_lea.sflag [#allocation4], 1
    %13 = vsyncpa %s12, 0
    %14 = vsyncpa [#allocation5], 0
    %s15 = scalar_lea.sflag [#allocation5], 1
    %16 = vsyncpa %s15, 0
    loop: start=0, step=1, limit=4
    $region2: #{tpu_custom_call.1} parent=1 // loop_pre_header
      _
    $region3: #{tpu_custom_call.1} parent=1 // loop_header
      %s18 = sphi 0, %s22
      %p19 = scmp.ge.s32.totalorder %s18, 4
      %s28 = sphi 0, %s30
      %s31 = sphi 0, %s28
      %s32 = sphi 0, %s31
      %s48 = sphi 0, %s32
      %s52 = sphi 0, %s52
      %s54 = sphi 0, %s52
      %s55 = sphi 0, %s54
      %s69 = sphi 0, %s55
      %s73 = sphi 0, %s73
      %s75 = sphi 0, %s73
      %s76 = sphi 0, %s75
      %s90 = sphi 0, %s76
      %s94 = sphi 0, %s94
      %s96 = sphi 0, %s94
      %s97 = sphi 0, %s96
      %s111 = sphi 0, %s97
      %s115 = sphi 0, %s115
      %s117 = sphi 0, %s115
      %s118 = sphi 0, %s117
      %s132 = sphi 0, %s118
      %s138 = sphi 0, %s140
      %s141 = sphi 0, %s138
      %s142 = sphi 0, %s141
      %s158 = sphi 0, %s142
    $region4: #{tpu_custom_call.1} parent=1 // loop_header_branch
      %21 = sbr.rel (%p19) target = $region8
    $region5: #{tpu_custom_call.1} parent=1 // loop_body
      %s23 = ssub.s32 %s18, 1
      %s24 = ssub.s32 %s18, 2
      %s25 = sadd.s32 %s18, 1
      %s26 = ssub.s32 %s18, %s25
      %p27 = scmp.eq.s32.totalorder %s26, 0
      %s29 = sadd.s32 %s28, 1
      %s30 = scalar_select %p27, %s28, %s29
      %p33 = pneg %p27
      %p34 = scmp.eq.s32.totalorder %s18, 1
      %p35 = por %p33, %p34
      %p36 = scmp.ne.s32.totalorder %s28, %s31
      %p37 = scmp.eq.s32.totalorder %s18, 0
      %p38 = por %p36, %p37
      %p39 = scmp.ne.s32.totalorder %s28, %s31
      %p40 = scmp.eq.s32.totalorder %s23, 1
      %p41 = por %p39, %p40
      %p42 = scmp.ne.s32.totalorder %s31, %s32
      %p43 = scmp.eq.s32.totalorder %s23, 0
      %p44 = por %p42, %p43
      %p45 = scmp.ne.s32.totalorder %s31, %s32
      %p46 = scmp.eq.s32.totalorder %s24, 1
      %p47 = por %p45, %p46
      %p49 = scmp.ne.s32.totalorder %s32, %s48
      %p50 = scmp.eq.s32.totalorder %s24, 0
      %p51 = por %p49, %p50
      %s53 = sadd.s32 %s52, 1
      %p56 = scmp.eq.s32.totalorder %s18, 1
      %p57 = scmp.ne.s32.totalorder %s52, %s54
      %p58 = scmp.eq.s32.totalorder %s18, 0
      %p59 = por %p57, %p58
      %p60 = scmp.ne.s32.totalorder %s52, %s54
      %p61 = scmp.eq.s32.totalorder %s23, 1
      %p62 = por %p60, %p61
      %p63 = scmp.ne.s32.totalorder %s54, %s55
      %p64 = scmp.eq.s32.totalorder %s23, 0
      %p65 = por %p63, %p64
      %p66 = scmp.ne.s32.totalorder %s54, %s55
      %p67 = scmp.eq.s32.totalorder %s24, 1
      %p68 = por %p66, %p67
      %p70 = scmp.ne.s32.totalorder %s55, %s69
      %p71 = scmp.eq.s32.totalorder %s24, 0
      %p72 = por %p70, %p71
      %s74 = sadd.s32 %s73, 1
      %p77 = scmp.eq.s32.totalorder %s18, 1
      %p78 = scmp.ne.s32.totalorder %s73, %s75
      %p79 = scmp.eq.s32.totalorder %s18, 0
      %p80 = por %p78, %p79
      %p81 = scmp.ne.s32.totalorder %s73, %s75
      %p82 = scmp.eq.s32.totalorder %s23, 1
      %p83 = por %p81, %p82
      %p84 = scmp.ne.s32.totalorder %s75, %s76
      %p85 = scmp.eq.s32.totalorder %s23, 0
      %p86 = por %p84, %p85
      %p87 = scmp.ne.s32.totalorder %s75, %s76
      %p88 = scmp.eq.s32.totalorder %s24, 1
      %p89 = por %p87, %p88
      %p91 = scmp.ne.s32.totalorder %s76, %s90
      %p92 = scmp.eq.s32.totalorder %s24, 0
      %p93 = por %p91, %p92
      %s95 = sadd.s32 %s94, 1
      %p98 = scmp.eq.s32.totalorder %s18, 1
      %p99 = scmp.ne.s32.totalorder %s94, %s96
      %p100 = scmp.eq.s32.totalorder %s18, 0
      %p101 = por %p99, %p100
      %p102 = scmp.ne.s32.totalorder %s94, %s96
      %p103 = scmp.eq.s32.totalorder %s23, 1
      %p104 = por %p102, %p103
      %p105 = scmp.ne.s32.totalorder %s96, %s97
      %p106 = scmp.eq.s32.totalorder %s23, 0
      %p107 = por %p105, %p106
      %p108 = scmp.ne.s32.totalorder %s96, %s97
      %p109 = scmp.eq.s32.totalorder %s24, 1
      %p110 = por %p108, %p109
      %p112 = scmp.ne.s32.totalorder %s97, %s111
      %p113 = scmp.eq.s32.totalorder %s24, 0
      %p114 = por %p112, %p113
      %s116 = sadd.s32 %s115, 1
      %p119 = scmp.eq.s32.totalorder %s18, 1
      %p120 = scmp.ne.s32.totalorder %s115, %s117
      %p121 = scmp.eq.s32.totalorder %s18, 0
      %p122 = por %p120, %p121
      %p123 = scmp.ne.s32.totalorder %s115, %s117
      %p124 = scmp.eq.s32.totalorder %s23, 1
      %p125 = por %p123, %p124
      %p126 = scmp.ne.s32.totalorder %s117, %s118
      %p127 = scmp.eq.s32.totalorder %s23, 0
      %p128 = por %p126, %p127
      %p129 = scmp.ne.s32.totalorder %s117, %s118
      %p130 = scmp.eq.s32.totalorder %s24, 1
      %p131 = por %p129, %p130
      %p133 = scmp.ne.s32.totalorder %s118, %s132
      %p134 = scmp.eq.s32.totalorder %s24, 0
      %p135 = por %p133, %p134
      %s136 = ssub.s32 %s18, %s25
      %p137 = scmp.eq.s32.totalorder %s136, 0
      %s139 = sadd.s32 %s138, 1
      %s140 = scalar_select %p137, %s138, %s139
      %p143 = pneg %p137
      %p144 = scmp.eq.s32.totalorder %s18, 1
      %p145 = por %p143, %p144
      %p146 = scmp.ne.s32.totalorder %s138, %s141
      %p147 = scmp.eq.s32.totalorder %s18, 0
      %p148 = por %p146, %p147
      %p149 = scmp.ne.s32.totalorder %s138, %s141
      %p150 = scmp.eq.s32.totalorder %s23, 1
      %p151 = por %p149, %p150
      %p152 = scmp.ne.s32.totalorder %s141, %s142
      %p153 = scmp.eq.s32.totalorder %s23, 0
      %p154 = por %p152, %p153
      %p155 = scmp.ne.s32.totalorder %s141, %s142
      %p156 = scmp.eq.s32.totalorder %s24, 1
      %p157 = por %p155, %p156
      %p159 = scmp.ne.s32.totalorder %s142, %s158
      %p160 = scmp.eq.s32.totalorder %s24, 0
      %p161 = por %p159, %p160
      %p162 = scmp.le.s32.totalorder 1, %s18
      %p163 = scmp.lt.s32.totalorder %s18, 3
      %p164 = pnand %p162, %p163
      %p165 = pneg %p164
      // Predicated region
      $region9: #{tpu_custom_call.1} parent=5 // pred_check
        _
      $region10: #{tpu_custom_call.1} parent=5 // pred_check_branch
        %167 = sbr.rel (%p164) target = $region12
      $region11: #{tpu_custom_call.1} parent=5 // pred_region
        %s168 = ssub.s32 %s18, 1
        // Predicated region
        $region13: #{tpu_custom_call.1} parent=11 // pred_check
          %p169 = pneg %p65
        $region14: #{tpu_custom_call.1} parent=11 // pred_check_branch
          %171 = sbr.rel (%p169) target = $region16
        $region15: #{tpu_custom_call.1} parent=11 // pred_region
          _
        $region16: #{tpu_custom_call.1} parent=11 // pred_fallthru
          _
        // Predicated region
        $region17: #{tpu_custom_call.1} parent=11 // pred_check
          %p172 = pneg %p86
        $region18: #{tpu_custom_call.1} parent=11 // pred_check_branch
          %174 = sbr.rel (%p172) target = $region20
        $region19: #{tpu_custom_call.1} parent=11 // pred_region
          _
        $region20: #{tpu_custom_call.1} parent=11 // pred_fallthru
          _
        // Predicated region
        $region21: #{tpu_custom_call.1} parent=11 // pred_check
          %p175 = pneg %p107
        $region22: #{tpu_custom_call.1} parent=11 // pred_check_branch
          %177 = sbr.rel (%p175) target = $region24
        $region23: #{tpu_custom_call.1} parent=11 // pred_region
          _
        $region24: #{tpu_custom_call.1} parent=11 // pred_fallthru
          _
        // Predicated region
        $region25: #{tpu_custom_call.1} parent=11 // pred_check
          %p178 = pneg %p128
        $region26: #{tpu_custom_call.1} parent=11 // pred_check_branch
          %180 = sbr.rel (%p178) target = $region28
        $region27: #{tpu_custom_call.1} parent=11 // pred_region
          _
        $region28: #{tpu_custom_call.1} parent=11 // pred_fallthru
          _
      $region12: #{tpu_custom_call.1} parent=5 // pred_fallthru
        _
      %p181 = scmp.lt.s32.totalorder %s18, 2
      // Predicated region
      $region29: #{tpu_custom_call.1} parent=5 // pred_check
        %p182 = pneg %p181
      $region30: #{tpu_custom_call.1} parent=5 // pred_check_branch
        %184 = sbr.rel (%p182) target = $region32
      $region31: #{tpu_custom_call.1} parent=5 // pred_region
        // Predicated region
        $region33: #{tpu_custom_call.1} parent=31 // pred_check
          %p185 = pneg %p38
        $region34: #{tpu_custom_call.1} parent=31 // pred_check_branch
          %187 = sbr.rel (%p185) target = $region36
        $region35: #{tpu_custom_call.1} parent=31 // pred_region
          %s188 = sand.u32 %s28, 1
          %s189 = scalar_lea.sflag [#allocation4], %s188
          %s190 = sand.u32 %s28, 1
          %s191 = smul.addr %s190, 64
          %s192 = scalar_lea.vmem [#allocation3], %s191
          %194 = vsyncadd %s189, 0
          %s195 = smul.addr %s18, 8
          %s196 = smul.addr %s195, 8
          %s197 = scalar_lea.hbm %s0, %s196
          %s198 = sshll.u32 %s197, 4
          %s199 = int_to_ptr.hbm [resolvable:$true] %s198
          %s200 = sshll.u32 %s192, 4
          %s201 = int_to_ptr.vmem [resolvable:$true] %s200
          %206 = dma.hbm_to_vmem [thread:$0]  %s199, 1024, %s201, %s189, 512, 512, 32
        $region36: #{tpu_custom_call.1} parent=31 // pred_fallthru
          _
      $region32: #{tpu_custom_call.1} parent=5 // pred_fallthru
        _
      %p207 = scmp.le.s32.totalorder 1, %s18
      %p208 = scmp.lt.s32.totalorder %s18, 3
      %p209 = pnand %p207, %p208
      %p210 = pneg %p209
      // Predicated region
      $region37: #{tpu_custom_call.1} parent=5 // pred_check
        _
      $region38: #{tpu_custom_call.1} parent=5 // pred_check_branch
        %212 = sbr.rel (%p209) target = $region40
      $region39: #{tpu_custom_call.1} parent=5 // pred_region
        %s213 = ssub.s32 %s18, 1
        %s214 = sand.u32 %s31, 1
        %s215 = scalar_lea.sflag [#allocation4], %s214
        %s216 = sand.u32 %s31, 1
        %s217 = smul.addr %s216, 64
        %s218 = scalar_lea.vmem [#allocation3], %s217
        // Predicated region
        $region41: #{tpu_custom_call.1} parent=39 // pred_check
          %p219 = pneg %p44
        $region42: #{tpu_custom_call.1} parent=39 // pred_check_branch
          %221 = sbr.rel (%p219) target = $region44
        $region43: #{tpu_custom_call.1} parent=39 // pred_region
          %223 = dma.done %s215, 1024
        $region44: #{tpu_custom_call.1} parent=39 // pred_fallthru
          _
        %s224 = sand.u32 %s31, 1
        %s225 = scalar_lea.sflag [#allocation4], %s224
        %s226 = sand.u32 %s31, 1
        %s227 = smul.addr %s226, 64
        %s228 = scalar_lea.vmem [#allocation3], %s227
        %p229 = pneg %p44
        %p230 = pneg %p41
        %p231 = pneg %p65
        %p232 = pneg %p62
        %p233 = pneg %p86
        %p234 = pneg %p83
        %p235 = pneg %p107
        %p236 = pneg %p104
        %p237 = pneg %p128
        %p238 = pneg %p125
        %p239 = pneg %p154
        %p240 = pneg %p151
        %s241 = sand.u32 %s141, 1
        %s242 = scalar_lea.sflag [#allocation5], %s241
        %s243 = sand.u32 %s141, 1
        %s244 = smul.addr %s243, 64
        %s245 = scalar_lea.vmem [#allocation6], %s244
        %v246 = vlaneseq
        %v247 = vand.u32 %v246, 127
        %v248 = vadd.s32 %v247, 128
        %v249 = vadd.s32 %v247, 256
        %v250 = vadd.s32 %v247, 384
        %v251 = vand.u32 %v247, 7
        %v252 = vand.u32 %v248, 7
        %v253 = vand.u32 %v249, 7
        %v254 = vand.u32 %v250, 7
        %v255 = vshra.s32 %v247, 3
        %v256 = vshra.s32 %v248, 3
        %v257 = vshra.s32 %v249, 3
        %v258 = vshra.s32 %v250, 3
        %v259 = vand.u32 %v255, 7
        %v260 = vand.u32 %v256, 7
        %v261 = vand.u32 %v257, 7
        %v262 = vand.u32 %v258, 7
        %v263 = vshra.s32 %v247, 6
        %v264 = vshra.s32 %v248, 6
        %v265 = vshra.s32 %v249, 6
        %v266 = vshra.s32 %v250, 6
        %v267 = vadd.s32 %v251, 4294967294
        %v268 = vadd.s32 %v252, 4294967294
        %v269 = vadd.s32 %v253, 4294967294
        %v270 = vadd.s32 %v254, 4294967294
        %vm271 = vcmp.ge.s32.totalorder %v267, 0
        %vm272 = vcmp.ge.s32.totalorder %v268, 0
        %vm273 = vcmp.ge.s32.totalorder %v269, 0
        %vm274 = vcmp.ge.s32.totalorder %v270, 0
        %vm275 = vcmp.lt.s32.totalorder %v267, 8
        %vm276 = vcmp.lt.s32.totalorder %v268, 8
        %vm277 = vcmp.lt.s32.totalorder %v269, 8
        %vm278 = vcmp.lt.s32.totalorder %v270, 8
        %vm279 = vmand %vm271, %vm275
        %vm280 = vmand %vm272, %vm276
        %vm281 = vmand %vm273, %vm277
        %vm282 = vmand %vm274, %vm278
        %v283 = vadd.s32 %v251, 4294967295
        %v284 = vadd.s32 %v252, 4294967295
        %v285 = vadd.s32 %v253, 4294967295
        %v286 = vadd.s32 %v254, 4294967295
        %vm287 = vcmp.ge.s32.totalorder %v283, 0
        %vm288 = vcmp.ge.s32.totalorder %v284, 0
        %vm289 = vcmp.ge.s32.totalorder %v285, 0
        %vm290 = vcmp.ge.s32.totalorder %v286, 0
        %vm291 = vcmp.lt.s32.totalorder %v283, 8
        %vm292 = vcmp.lt.s32.totalorder %v284, 8
        %vm293 = vcmp.lt.s32.totalorder %v285, 8
        %vm294 = vcmp.lt.s32.totalorder %v286, 8
        %vm295 = vmand %vm287, %vm291
        %vm296 = vmand %vm288, %vm292
        %vm297 = vmand %vm289, %vm293
        %vm298 = vmand %vm290, %vm294
        %vm299 = vcmp.ge.s32.totalorder %v251, 0
        %vm300 = vcmp.ge.s32.totalorder %v252, 0
        %vm301 = vcmp.ge.s32.totalorder %v253, 0
        %vm302 = vcmp.ge.s32.totalorder %v254, 0
        %vm303 = vcmp.lt.s32.totalorder %v251, 8
        %vm304 = vcmp.lt.s32.totalorder %v252, 8
        %vm305 = vcmp.lt.s32.totalorder %v253, 8
        %vm306 = vcmp.lt.s32.totalorder %v254, 8
        %vm307 = vmand %vm299, %vm303
        %vm308 = vmand %vm300, %vm304
        %vm309 = vmand %vm301, %vm305
        %vm310 = vmand %vm302, %vm306
        %v311 = vadd.s32 %v251, 1
        %v312 = vadd.s32 %v252, 1
        %v313 = vadd.s32 %v253, 1
        %v314 = vadd.s32 %v254, 1
        %vm315 = vcmp.ge.s32.totalorder %v311, 0
        %vm316 = vcmp.ge.s32.totalorder %v312, 0
        %vm317 = vcmp.ge.s32.totalorder %v313, 0
        %vm318 = vcmp.ge.s32.totalorder %v314, 0
        %vm319 = vcmp.lt.s32.totalorder %v311, 8
        %vm320 = vcmp.lt.s32.totalorder %v312, 8
        %vm321 = vcmp.lt.s32.totalorder %v313, 8
        %vm322 = vcmp.lt.s32.totalorder %v314, 8
        %vm323 = vmand %vm315, %vm319
        %vm324 = vmand %vm316, %vm320
        %vm325 = vmand %vm317, %vm321
        %vm326 = vmand %vm318, %vm322
        %v327 = vadd.s32 %v251, 2
        %v328 = vadd.s32 %v252, 2
        %v329 = vadd.s32 %v253, 2
        %v330 = vadd.s32 %v254, 2
        %vm331 = vcmp.ge.s32.totalorder %v327, 0
        %vm332 = vcmp.ge.s32.totalorder %v328, 0
        %vm333 = vcmp.ge.s32.totalorder %v329, 0
        %vm334 = vcmp.ge.s32.totalorder %v330, 0
        %vm335 = vcmp.lt.s32.totalorder %v327, 8
        %vm336 = vcmp.lt.s32.totalorder %v328, 8
        %vm337 = vcmp.lt.s32.totalorder %v329, 8
        %vm338 = vcmp.lt.s32.totalorder %v330, 8
        %vm339 = vmand %vm331, %vm335
        %vm340 = vmand %vm332, %vm336
        %vm341 = vmand %vm333, %vm337
        %vm342 = vmand %vm334, %vm338
        %v343 = vadd.s32 %v259, 4294967294
        %v344 = vadd.s32 %v260, 4294967294
        %v345 = vadd.s32 %v261, 4294967294
        %v346 = vadd.s32 %v262, 4294967294
        %vm347 = vcmp.ge.s32.totalorder %v343, 0
        %vm348 = vcmp.ge.s32.totalorder %v344, 0
        %vm349 = vcmp.ge.s32.totalorder %v345, 0
        %vm350 = vcmp.ge.s32.totalorder %v346, 0
        %vm351 = vcmp.lt.s32.totalorder %v343, 8
        %vm352 = vcmp.lt.s32.totalorder %v344, 8
        %vm353 = vcmp.lt.s32.totalorder %v345, 8
        %vm354 = vcmp.lt.s32.totalorder %v346, 8
        %vm355 = vmand %vm347, %vm351
        %vm356 = vmand %vm348, %vm352
        %vm357 = vmand %vm349, %vm353
        %vm358 = vmand %vm350, %vm354
        %v359 = vadd.s32 %v259, 4294967295
        %v360 = vadd.s32 %v260, 4294967295
        %v361 = vadd.s32 %v261, 4294967295
        %v362 = vadd.s32 %v262, 4294967295
        %vm363 = vcmp.ge.s32.totalorder %v359, 0
        %vm364 = vcmp.ge.s32.totalorder %v360, 0
        %vm365 = vcmp.ge.s32.totalorder %v361, 0
        %vm366 = vcmp.ge.s32.totalorder %v362, 0
        %vm367 = vcmp.lt.s32.totalorder %v359, 8
        %vm368 = vcmp.lt.s32.totalorder %v360, 8
        %vm369 = vcmp.lt.s32.totalorder %v361, 8
        %vm370 = vcmp.lt.s32.totalorder %v362, 8
        %vm371 = vmand %vm363, %vm367
        %vm372 = vmand %vm364, %vm368
        %vm373 = vmand %vm365, %vm369
        %vm374 = vmand %vm366, %vm370
        %vm375 = vcmp.ge.s32.totalorder %v259, 0
        %vm376 = vcmp.ge.s32.totalorder %v260, 0
        %vm377 = vcmp.ge.s32.totalorder %v261, 0
        %vm378 = vcmp.ge.s32.totalorder %v262, 0
        %vm379 = vcmp.lt.s32.totalorder %v259, 8
        %vm380 = vcmp.lt.s32.totalorder %v260, 8
        %vm381 = vcmp.lt.s32.totalorder %v261, 8
        %vm382 = vcmp.lt.s32.totalorder %v262, 8
        %vm383 = vmand %vm375, %vm379
        %vm384 = vmand %vm376, %vm380
        %vm385 = vmand %vm377, %vm381
        %vm386 = vmand %vm378, %vm382
        %v387 = vadd.s32 %v259, 1
        %v388 = vadd.s32 %v260, 1
        %v389 = vadd.s32 %v261, 1
        %v390 = vadd.s32 %v262, 1
        %vm391 = vcmp.ge.s32.totalorder %v387, 0
        %vm392 = vcmp.ge.s32.totalorder %v388, 0
        %vm393 = vcmp.ge.s32.totalorder %v389, 0
        %vm394 = vcmp.ge.s32.totalorder %v390, 0
        %vm395 = vcmp.lt.s32.totalorder %v387, 8
        %vm396 = vcmp.lt.s32.totalorder %v388, 8
        %vm397 = vcmp.lt.s32.totalorder %v389, 8
        %vm398 = vcmp.lt.s32.totalorder %v390, 8
        %vm399 = vmand %vm391, %vm395
        %vm400 = vmand %vm392, %vm396
        %vm401 = vmand %vm393, %vm397
        %vm402 = vmand %vm394, %vm398
        %v403 = vadd.s32 %v259, 2
        %v404 = vadd.s32 %v260, 2
        %v405 = vadd.s32 %v261, 2
        %v406 = vadd.s32 %v262, 2
        %vm407 = vcmp.ge.s32.totalorder %v403, 0
        %vm408 = vcmp.ge.s32.totalorder %v404, 0
        %vm409 = vcmp.ge.s32.totalorder %v405, 0
        %vm410 = vcmp.ge.s32.totalorder %v406, 0
        %vm411 = vcmp.lt.s32.totalorder %v403, 8
        %vm412 = vcmp.lt.s32.totalorder %v404, 8
        %vm413 = vcmp.lt.s32.totalorder %v405, 8
        %vm414 = vcmp.lt.s32.totalorder %v406, 8
        %vm415 = vmand %vm407, %vm411
        %vm416 = vmand %vm408, %vm412
        %vm417 = vmand %vm409, %vm413
        %vm418 = vmand %vm410, %vm414
        %v419 = vadd.s32 %v263, 4294967294
        %v420 = vadd.s32 %v264, 4294967294
        %v421 = vadd.s32 %v265, 4294967294
        %v422 = vadd.s32 %v266, 4294967294
        %vm423 = vcmp.ge.s32.totalorder %v419, 0
        %vm424 = vcmp.ge.s32.totalorder %v420, 0
        %vm425 = vcmp.ge.s32.totalorder %v421, 0
        %vm426 = vcmp.ge.s32.totalorder %v422, 0
        %vm427 = vcmp.lt.s32.totalorder %v419, 8
        %vm428 = vcmp.lt.s32.totalorder %v420, 8
        %vm429 = vcmp.lt.s32.totalorder %v421, 8
        %vm430 = vcmp.lt.s32.totalorder %v422, 8
        %vm431 = vmand %vm423, %vm427
        %vm432 = vmand %vm424, %vm428
        %vm433 = vmand %vm425, %vm429
        %vm434 = vmand %vm426, %vm430
        %v435 = vadd.s32 %v263, 4294967295
        %v436 = vadd.s32 %v264, 4294967295
        %v437 = vadd.s32 %v265, 4294967295
        %v438 = vadd.s32 %v266, 4294967295
        %vm439 = vcmp.ge.s32.totalorder %v435, 0
        %vm440 = vcmp.ge.s32.totalorder %v436, 0
        %vm441 = vcmp.ge.s32.totalorder %v437, 0
        %vm442 = vcmp.ge.s32.totalorder %v438, 0
        %vm443 = vcmp.lt.s32.totalorder %v435, 8
        %vm444 = vcmp.lt.s32.totalorder %v436, 8
        %vm445 = vcmp.lt.s32.totalorder %v437, 8
        %vm446 = vcmp.lt.s32.totalorder %v438, 8
        %vm447 = vmand %vm439, %vm443
        %vm448 = vmand %vm440, %vm444
        %vm449 = vmand %vm441, %vm445
        %vm450 = vmand %vm442, %vm446
        %vm451 = vcmp.ge.s32.totalorder %v263, 0
        %vm452 = vcmp.ge.s32.totalorder %v264, 0
        %vm453 = vcmp.ge.s32.totalorder %v265, 0
        %vm454 = vcmp.ge.s32.totalorder %v266, 0
        %vm455 = vcmp.lt.s32.totalorder %v263, 8
        %vm456 = vcmp.lt.s32.totalorder %v264, 8
        %vm457 = vcmp.lt.s32.totalorder %v265, 8
        %vm458 = vcmp.lt.s32.totalorder %v266, 8
        %vm459 = vmand %vm451, %vm455
        %vm460 = vmand %vm452, %vm456
        %vm461 = vmand %vm453, %vm457
        %vm462 = vmand %vm454, %vm458
        %v463 = vadd.s32 %v263, 1
        %v464 = vadd.s32 %v264, 1
        %v465 = vadd.s32 %v265, 1
        %v466 = vadd.s32 %v266, 1
        %vm467 = vcmp.ge.s32.totalorder %v463, 0
        %vm468 = vcmp.ge.s32.totalorder %v464, 0
        %vm469 = vcmp.ge.s32.totalorder %v465, 0
        %vm470 = vcmp.ge.s32.totalorder %v466, 0
        %vm471 = vcmp.lt.s32.totalorder %v463, 8
        %vm472 = vcmp.lt.s32.totalorder %v464, 8
        %vm473 = vcmp.lt.s32.totalorder %v465, 8
        %vm474 = vcmp.lt.s32.totalorder %v466, 8
        %vm475 = vmand %vm467, %vm471
        %vm476 = vmand %vm468, %vm472
        %vm477 = vmand %vm469, %vm473
        %vm478 = vmand %vm470, %vm474
        %v479 = vadd.s32 %v263, 2
        %v480 = vadd.s32 %v264, 2
        %v481 = vadd.s32 %v265, 2
        %v482 = vadd.s32 %v266, 2
        %vm483 = vcmp.ge.s32.totalorder %v479, 0
        %vm484 = vcmp.ge.s32.totalorder %v480, 0
        %vm485 = vcmp.ge.s32.totalorder %v481, 0
        %vm486 = vcmp.ge.s32.totalorder %v482, 0
        %vm487 = vcmp.lt.s32.totalorder %v479, 8
        %vm488 = vcmp.lt.s32.totalorder %v480, 8
        %vm489 = vcmp.lt.s32.totalorder %v481, 8
        %vm490 = vcmp.lt.s32.totalorder %v482, 8
        %vm491 = vmand %vm483, %vm487
        %vm492 = vmand %vm484, %vm488
        %vm493 = vmand %vm485, %vm489
        %vm494 = vmand %vm486, %vm490
        %v495 = vld [vmem:[%s1] sm:$0x3]
        %v496 = vld [vmem:[%s2] sm:$0xff]
        %v497 = vld [vmem:[%s2 + $0x8] sm:$0xff]
        %v498 = vld [vmem:[%s3] sm:$0xff]
        %v499 = vld [vmem:[%s3 + $0x8] sm:$0xff]
        %v500 = vld [vmem:[%s3 + $0x10] sm:$0xff]
        %v501 = vld [vmem:[%s3 + $0x18] sm:$0xff]
        %v502 = vld [vmem:[%s3 + $0x20] sm:$0xff]
        %s503 = sld [smem:[#allocation2]]
        %v504 = vld [vmem:[%s218] sm:$0xff]
        %v505 = vld [vmem:[%s218 + $0x8] sm:$0xff]
        %v506 = vld [vmem:[%s218 + $0x10] sm:$0xff]
        %v507 = vld [vmem:[%s218 + $0x18] sm:$0xff]
        %v508 = vld [vmem:[%s218 + $0x20] sm:$0xff]
        %v509 = vld [vmem:[%s218 + $0x28] sm:$0xff]
        %v510 = vld [vmem:[%s218 + $0x30] sm:$0xff]
        %v511 = vld [vmem:[%s218 + $0x38] sm:$0xff]
        %v512 = vadd.f32 %v504, %v505
        %v513 = vadd.f32 %v512, %v506
        %v514 = vadd.f32 %v513, %v507
        %515 = vadd.xlane.f32.xlu0 %v514
        %v516 = vpop.xlane.xlu0 %515
        %v517 = vadd.f32 %v508, %v509
        %v518 = vadd.f32 %v517, %v510
        %v519 = vadd.f32 %v518, %v511
        %520 = vadd.xlane.f32.xlu0 %v519
        %v521 = vpop.xlane.xlu0 %520
        %v522 = vrcp.pop 512.0
        %v523 = vmul.f32 512.0, %v522
        %v524 = vsub.f32 1.0, %v523
        %v525 = vmul.f32 %v522, %v524
        %v526 = vadd.f32 %v522, %v525
        %vm527 = vweird.f32 %v522
        %v528 = vsel %vm527, %v522, %v526
        %v529 = vmul.f32 %v516, %v528
        %v530 = vmul.f32 %v521, %v528
        %v531 = vmax.f32 %v504, %v506
        %v532 = vmax.f32 %v505, %v507
        %v533 = vmax.f32 %v531, %v532
        %534 = vmax.xlane.f32.xlu0 %v533
        %v535 = vpop.xlane.xlu0 %534
        %v536 = vmax.f32 %v508, %v510
        %v537 = vmax.f32 %v509, %v511
        %v538 = vmax.f32 %v536, %v537
        %539 = vmax.xlane.f32.xlu0 %v538
        %v540 = vpop.xlane.xlu0 %539
        %vm541 = vcmask 7168
        %v542 = vsel %vm541, %v529, %v535
        %v543 = vsel %vm541, %v530, %v540
        %vm544 = vcmask 130048
        %v546 = vsel %vm544, %v495, 0
        %548 = vmatpush.msra.mxu0 0.0
        %549 = vmatpush.msra.mxu0 0.0
        %550 = vmatpush.msra.mxu0 0.0
        %551 = vmatpush.msra.mxu0 0.0
        %552 = vmatpush.msra.mxu0 0.0
        %553 = vmatpush.msra.mxu0 0.0
        %554 = vmatpush.msra.mxu0 0.0
        %555 = vmatpush.msra.mxu0 0.0
        %556 = vmatpush.msra.mxu0 0.0
        %557 = vmatpush.msra.mxu0 0.0
        %558 = vmatpush.msra.mxu0 0.0
        %559 = vmatpush.msra.mxu0 0.0
        %560 = vmatpush.msra.mxu0 0.0
        %561 = vmatpush.msra.mxu0 0.0
        %562 = vmatpush.msra.mxu0 %v543
        %563 = vmatpush.msra.mxu0 %v542
        %564 = vmatmul.f32.gmra.mxu0 %v546
        %v565 = vpop.f32.mrf.mxu0
        %v566 = vadd.f32 0.0, %v565
        %567 = vdwg.mxu0
        %v568 = vmax.f32 %v566, 0.0
        %vm569 = vcmask 15360
        %v571 = vsel %vm569, %v496, 0
        %v574 = vsel %vm569, %v497, 0
        %vm576 = vcmask 1041408
        %v578 = vsel %vm576, %v568, 0
        %580 = vmatpush.msra.mxu0 0.0
        %581 = vmatpush.msra.mxu0 0.0
        %582 = vmatpush.msra.mxu0 0.0
        %583 = vmatpush.msra.mxu0 0.0
        %584 = vmatpush.msra.mxu0 0.0
        %585 = vmatpush.msra.mxu0 0.0
        %586 = vmatpush.msra.mxu0 0.0
        %587 = vmatpush.msra.mxu0 0.0
        %588 = vmatpush.msra.mxu0 0.0
        %589 = vmatpush.msra.mxu0 0.0
        %590 = vmatpush.msra.mxu0 0.0
        %591 = vmatpush.msra.mxu0 0.0
        %592 = vmatpush.msra.mxu0 0.0
        %593 = vmatpush.msra.mxu0 0.0
        %594 = vmatpush.msra.mxu0 0.0
        %595 = vmatpush.msra.mxu0 %v578
        %596 = vmatmul.f32.gmra.mxu0 %v571
        %v597 = vpop.f32.mrf.mxu0
        %v598 = vadd.f32 0.0, %v597
        %599 = vmatmul.f32.gmra.mxu0 %v574
        %v600 = vpop.f32.mrf.mxu0
        %v601 = vadd.f32 0.0, %v600
        %602 = vdwg.mxu0
        %605 = vrot.lane.b32.xlu0 %v598, 127
        %v606 = vpop.permute.xlu0 %605
        %607 = vrot.lane.b32.xlu0 %v601, 127
        %v608 = vpop.permute.xlu0 %607
        %v611 = vadd.f32 %v598, %v606
        %v612 = vadd.f32 %v601, %v608
        %v613 = vxor.u32 %v611, 2147483648
        %v614 = vxor.u32 %v612, 2147483648
        %v615 = vmul.f32 %v613, 1.442695
        %v616 = vpow.pop %v615
        %v617 = vmul.f32 %v614, 1.442695
        %v618 = vpow.pop %v617
        %v619 = vadd.f32 %v616, 1.0
        %v620 = vadd.f32 %v618, 1.0
        %v621 = vrcp.pop %v619
        %v622 = vmul.f32 %v619, %v621
        %v623 = vsub.f32 1.0, %v622
        %v624 = vmul.f32 %v621, %v623
        %v625 = vadd.f32 %v621, %v624
        %vm626 = vweird.f32 %v619
        %vm627 = vweird.f32 %v621
        %vm628 = vmor %vm626, %vm627
        %v629 = vsel %vm628, %v621, %v625
        %v630 = vand.u32 2147483647, %v619
        %vm631 = vcmp.eq.f32.partialorder %v630, 8.507059e+37
        %v632 = vand.u32 %v619, 2147483648
        %v633 = vor.u32 1.1754944e-38, %v632
        %v634 = vsel %vm631, %v633, %v629
        %v635 = vmul.f32 1.0, %v634
        %v636 = vrcp.pop %v620
        %v637 = vmul.f32 %v620, %v636
        %v638 = vsub.f32 1.0, %v637
        %v639 = vmul.f32 %v636, %v638
        %v640 = vadd.f32 %v636, %v639
        %vm641 = vweird.f32 %v620
        %vm642 = vweird.f32 %v636
        %vm643 = vmor %vm641, %vm642
        %v644 = vsel %vm643, %v636, %v640
        %v645 = vand.u32 2147483647, %v620
        %vm646 = vcmp.eq.f32.partialorder %v645, 8.507059e+37
        %v647 = vand.u32 %v620, 2147483648
        %v648 = vor.u32 1.1754944e-38, %v647
        %v649 = vsel %vm646, %v648, %v644
        %v650 = vmul.f32 1.0, %v649
        %652 = vset.pattern.permute.xlu0 0
        %653 = vperm.xlu0 %652, %v635
        %v654 = vpop.permute.xlu0 %653
        %657 = vset.pattern.permute.xlu0 0
        %658 = vperm.xlu0 %657, %v650
        %v659 = vpop.permute.xlu0 %658
        %v661 = vmul.f32 %v654, %v504
        %v662 = vmul.f32 %v654, %v505
        %v663 = vmul.f32 %v654, %v506
        %v664 = vmul.f32 %v654, %v507
        %v665 = vmul.f32 %v659, %v508
        %v666 = vmul.f32 %v659, %v509
        %v667 = vmul.f32 %v659, %v510
        %v668 = vmul.f32 %v659, %v511
        %v669 = vadd.f32 %v661, %v665
        %v670 = vrot.slane %v669, 4
        %v671 = vadd.f32 %v669, %v670
        %v672 = vrot.slane %v671, 2
        %v673 = vadd.f32 %v671, %v672
        %v674 = vrot.slane %v673, 1
        %v675 = vadd.f32 %v673, %v674
        %v676 = vadd.f32 %v662, %v666
        %v677 = vrot.slane %v676, 4
        %v678 = vadd.f32 %v676, %v677
        %v679 = vrot.slane %v678, 2
        %v680 = vadd.f32 %v678, %v679
        %v681 = vrot.slane %v680, 1
        %v682 = vadd.f32 %v680, %v681
        %v683 = vadd.f32 %v663, %v667
        %v684 = vrot.slane %v683, 4
        %v685 = vadd.f32 %v683, %v684
        %v686 = vrot.slane %v685, 2
        %v687 = vadd.f32 %v685, %v686
        %v688 = vrot.slane %v687, 1
        %v689 = vadd.f32 %v687, %v688
        %v690 = vadd.f32 %v664, %v668
        %v691 = vrot.slane %v690, 4
        %v692 = vadd.f32 %v690, %v691
        %v693 = vrot.slane %v692, 2
        %v694 = vadd.f32 %v692, %v693
        %v695 = vrot.slane %v694, 1
        %v696 = vadd.f32 %v694, %v695
        %v697 = vrcp.pop 16.0
        %v698 = vmul.f32 16.0, %v697
        %v699 = vsub.f32 1.0, %v698
        %v700 = vmul.f32 %v697, %v699
        %v701 = vadd.f32 %v697, %v700
        %vm702 = vweird.f32 %v697
        %v703 = vsel %vm702, %v697, %v701
        %v704 = vmul.f32 %v675, %v703
        %v705 = vmul.f32 %v682, %v703
        %v706 = vmul.f32 %v689, %v703
        %v707 = vmul.f32 %v696, %v703
        %v708 = vmax.f32 %v661, %v665
        %v709 = vrot.slane %v708, 4
        %v710 = vmax.f32 %v708, %v709
        %v711 = vrot.slane %v710, 2
        %v712 = vmax.f32 %v710, %v711
        %v713 = vrot.slane %v712, 1
        %v714 = vmax.f32 %v712, %v713
        %v715 = vmax.f32 %v662, %v666
        %v716 = vrot.slane %v715, 4
        %v717 = vmax.f32 %v715, %v716
        %v718 = vrot.slane %v717, 2
        %v719 = vmax.f32 %v717, %v718
        %v720 = vrot.slane %v719, 1
        %v721 = vmax.f32 %v719, %v720
        %v722 = vmax.f32 %v663, %v667
        %v723 = vrot.slane %v722, 4
        %v724 = vmax.f32 %v722, %v723
        %v725 = vrot.slane %v724, 2
        %v726 = vmax.f32 %v724, %v725
        %v727 = vrot.slane %v726, 1
        %v728 = vmax.f32 %v726, %v727
        %v729 = vmax.f32 %v664, %v668
        %v730 = vrot.slane %v729, 4
        %v731 = vmax.f32 %v729, %v730
        %v732 = vrot.slane %v731, 2
        %v733 = vmax.f32 %v731, %v732
        %v734 = vrot.slane %v733, 1
        %v735 = vmax.f32 %v733, %v734
        %vm736 = vcmask 1040384
        %v737 = vsel %vm736, %v704, %v714
        %v738 = vsel %vm736, %v705, %v721
        %v739 = vsel %vm736, %v706, %v728
        %v740 = vsel %vm736, %v707, %v735
        %741 = vrot.lane.b32.xlu0 %v737, 2
        %v742 = vpop.permute.xlu0 %741
        %743 = vrot.lane.b32.xlu0 %v738, 2
        %v744 = vpop.permute.xlu0 %743
        %745 = vrot.lane.b32.xlu0 %v739, 2
        %v746 = vpop.permute.xlu0 %745
        %747 = vrot.lane.b32.xlu0 %v740, 2
        %v748 = vpop.permute.xlu0 %747
        %vm749 = vcmp.lt.s32.totalorder %v247, 2
        %v750 = vsel %vm749, %v746, %v748
        %v751 = vsel %vm749, %v744, %v746
        %v752 = vsel %vm749, %v742, %v744
        %v753 = vsel %vm749, %v748, %v742
        %v754 = vsel %vm279, 1, 0
        %v755 = vsel %vm280, 1, 0
        %v756 = vsel %vm281, 1, 0
        %v757 = vsel %vm282, 1, 0
        %vm758 = vcmp.eq.s32.totalorder %v754, 1
        %vm759 = vcmp.eq.s32.totalorder %v755, 1
        %vm760 = vcmp.eq.s32.totalorder %v756, 1
        %vm761 = vcmp.eq.s32.totalorder %v757, 1
        %v762 = vsel %vm758, %v753, 0.0
        %v763 = vsel %vm759, %v752, 0.0
        %v764 = vsel %vm760, %v751, 0.0
        %v765 = vsel %vm761, %v750, 0.0
        %766 = vrot.lane.b32.xlu0 %v737, 1
        %v767 = vpop.permute.xlu0 %766
        %768 = vrot.lane.b32.xlu0 %v738, 1
        %v769 = vpop.permute.xlu0 %768
        %770 = vrot.lane.b32.xlu0 %v739, 1
        %v771 = vpop.permute.xlu0 %770
        %772 = vrot.lane.b32.xlu0 %v740, 1
        %v773 = vpop.permute.xlu0 %772
        %vm774 = vcmp.lt.s32.totalorder %v247, 1
        %v775 = vsel %vm774, %v771, %v773
        %v776 = vsel %vm774, %v769, %v771
        %v777 = vsel %vm774, %v767, %v769
        %v778 = vsel %vm774, %v773, %v767
        %v779 = vsel %vm295, 1, 0
        %v780 = vsel %vm296, 1, 0
        %v781 = vsel %vm297, 1, 0
        %v782 = vsel %vm298, 1, 0
        %vm783 = vcmp.eq.s32.totalorder %v779, 1
        %vm784 = vcmp.eq.s32.totalorder %v780, 1
        %vm785 = vcmp.eq.s32.totalorder %v781, 1
        %vm786 = vcmp.eq.s32.totalorder %v782, 1
        %v787 = vsel %vm783, %v778, 0.0
        %v788 = vsel %vm784, %v777, 0.0
        %v789 = vsel %vm785, %v776, 0.0
        %v790 = vsel %vm786, %v775, 0.0
        %v791 = vsel %vm307, 1, 0
        %v792 = vsel %vm308, 1, 0
        %v793 = vsel %vm309, 1, 0
        %v794 = vsel %vm310, 1, 0
        %vm795 = vcmp.eq.s32.totalorder %v791, 1
        %vm796 = vcmp.eq.s32.totalorder %v792, 1
        %vm797 = vcmp.eq.s32.totalorder %v793, 1
        %vm798 = vcmp.eq.s32.totalorder %v794, 1
        %v799 = vsel %vm795, %v737, 0.0
        %v800 = vsel %vm796, %v738, 0.0
        %v801 = vsel %vm797, %v739, 0.0
        %v802 = vsel %vm798, %v740, 0.0
        %803 = vrot.lane.b32.xlu0 %v737, 127
        %v804 = vpop.permute.xlu0 %803
        %805 = vrot.lane.b32.xlu0 %v738, 127
        %v806 = vpop.permute.xlu0 %805
        %807 = vrot.lane.b32.xlu0 %v739, 127
        %v808 = vpop.permute.xlu0 %807
        %809 = vrot.lane.b32.xlu0 %v740, 127
        %v810 = vpop.permute.xlu0 %809
        %vm811 = vcmp.lt.s32.totalorder %v247, 127
        %v812 = vsel %vm811, %v808, %v810
        %v813 = vsel %vm811, %v806, %v808
        %v814 = vsel %vm811, %v804, %v806
        %v815 = vsel %vm811, %v810, %v804
        %v816 = vsel %vm323, 1, 0
        %v817 = vsel %vm324, 1, 0
        %v818 = vsel %vm325, 1, 0
        %v819 = vsel %vm326, 1, 0
        %vm820 = vcmp.eq.s32.totalorder %v816, 1
        %vm821 = vcmp.eq.s32.totalorder %v817, 1
        %vm822 = vcmp.eq.s32.totalorder %v818, 1
        %vm823 = vcmp.eq.s32.totalorder %v819, 1
        %v824 = vsel %vm820, %v814, 0.0
        %v825 = vsel %vm821, %v813, 0.0
        %v826 = vsel %vm822, %v812, 0.0
        %v827 = vsel %vm823, %v815, 0.0
        %828 = vrot.lane.b32.xlu0 %v737, 126
        %v829 = vpop.permute.xlu0 %828
        %830 = vrot.lane.b32.xlu0 %v738, 126
        %v831 = vpop.permute.xlu0 %830
        %832 = vrot.lane.b32.xlu0 %v739, 126
        %v833 = vpop.permute.xlu0 %832
        %834 = vrot.lane.b32.xlu0 %v740, 126
        %v835 = vpop.permute.xlu0 %834
        %vm836 = vcmp.lt.s32.totalorder %v247, 126
        %v837 = vsel %vm836, %v833, %v835
        %v838 = vsel %vm836, %v831, %v833
        %v839 = vsel %vm836, %v829, %v831
        %v840 = vsel %vm836, %v835, %v829
        %v841 = vsel %vm339, 1, 0
        %v842 = vsel %vm340, 1, 0
        %v843 = vsel %vm341, 1, 0
        %v844 = vsel %vm342, 1, 0
        %vm845 = vcmp.eq.s32.totalorder %v841, 1
        %vm846 = vcmp.eq.s32.totalorder %v842, 1
        %vm847 = vcmp.eq.s32.totalorder %v843, 1
        %vm848 = vcmp.eq.s32.totalorder %v844, 1
        %v849 = vsel %vm845, %v839, 0.0
        %v850 = vsel %vm846, %v838, 0.0
        %v851 = vsel %vm847, %v837, 0.0
        %v852 = vsel %vm848, %v840, 0.0
        %v857 = vrot.slane %v787, 6
        %v858 = vrot.slane %v788, 6
        %v859 = vrot.slane %v789, 6
        %v860 = vrot.slane %v790, 6
        %v869 = vrot.slane %v799, 4
        %v870 = vrot.slane %v800, 4
        %v871 = vrot.slane %v801, 4
        %v872 = vrot.slane %v802, 4
        %v881 = vrot.slane %v824, 2
        %v882 = vrot.slane %v825, 2
        %v883 = vrot.slane %v826, 2
        %v884 = vrot.slane %v827, 2
        %v889 = vsel %vm576, %v762, %v857
        %v890 = vsel %vm576, %v763, %v858
        %v891 = vsel %vm576, %v764, %v859
        %v892 = vsel %vm576, %v765, %v860
        %vm893 = vcmask 1043456
        %v894 = vsel %vm893, %v889, %v869
        %v895 = vsel %vm893, %v890, %v870
        %v896 = vsel %vm893, %v891, %v871
        %v897 = vsel %vm893, %v892, %v872
        %vm898 = vcmask 1045504
        %v899 = vsel %vm898, %v894, %v881
        %v900 = vsel %vm898, %v895, %v882
        %v901 = vsel %vm898, %v896, %v883
        %v902 = vsel %vm898, %v897, %v884
        %vm903 = vcmask 80896
        %v905 = vsel %vm903, %v498, 0
        %v908 = vsel %vm903, %v499, 0
        %v911 = vsel %vm903, %v500, 0
        %v914 = vsel %vm903, %v501, 0
        %v917 = vsel %vm903, %v502, 0
        %v920 = vsel %vm576, %v849, 0
        %v923 = vsel %vm576, %v850, 0
        %v926 = vsel %vm576, %v851, 0
        %v929 = vsel %vm576, %v852, 0
        %931 = vmatpush.msra.mxu0 0.0
        %932 = vmatpush.msra.mxu0 0.0
        %933 = vmatpush.msra.mxu0 0.0
        %934 = vmatpush.msra.mxu0 0.0
        %935 = vmatpush.msra.mxu0 0.0
        %936 = vmatpush.msra.mxu0 0.0
        %937 = vmatpush.msra.mxu0 0.0
        %938 = vmatpush.msra.mxu0 0.0
        %939 = vmatpush.msra.mxu0 0.0
        %940 = vmatpush.msra.mxu0 0.0
        %941 = vmatpush.msra.mxu0 0.0
        %942 = vmatpush.msra.mxu0 0.0
        %943 = vmatpush.msra.mxu0 0.0
        %944 = vmatpush.msra.mxu0 0.0
        %945 = vmatpush.msra.mxu0 %v920
        %946 = vmatpush.msra.mxu0 %v899
        %947 = vmatmul.f32.gmra.mxu0 %v905
        %v948 = vpop.f32.mrf.mxu0
        %v949 = vadd.f32 0.0, %v948
        %950 = vmatmul.f32.gmra.mxu0 %v908
        %v951 = vpop.f32.mrf.mxu0
        %v952 = vadd.f32 0.0, %v951
        %953 = vmatmul.f32.gmra.mxu0 %v911
        %v954 = vpop.f32.mrf.mxu0
        %v955 = vadd.f32 0.0, %v954
        %956 = vmatmul.f32.gmra.mxu0 %v914
        %v957 = vpop.f32.mrf.mxu0
        %v958 = vadd.f32 0.0, %v957
        %959 = vmatmul.f32.gmra.mxu0 %v917
        %v960 = vpop.f32.mrf.mxu0
        %v961 = vadd.f32 0.0, %v960
        %962 = vdwg.mxu0
        %963 = vmatpush.msra.mxu0 0.0
        %964 = vmatpush.msra.mxu0 0.0
        %965 = vmatpush.msra.mxu0 0.0
        %966 = vmatpush.msra.mxu0 0.0
        %967 = vmatpush.msra.mxu0 0.0
        %968 = vmatpush.msra.mxu0 0.0
        %969 = vmatpush.msra.mxu0 0.0
        %970 = vmatpush.msra.mxu0 0.0
        %971 = vmatpush.msra.mxu0 0.0
        %972 = vmatpush.msra.mxu0 0.0
        %973 = vmatpush.msra.mxu0 0.0
        %974 = vmatpush.msra.mxu0 0.0
        %975 = vmatpush.msra.mxu0 0.0
        %976 = vmatpush.msra.mxu0 0.0
        %977 = vmatpush.msra.mxu0 %v923
        %978 = vmatpush.msra.mxu0 %v900
        %979 = vmatmul.f32.gmra.mxu0 %v905
        %v980 = vpop.f32.mrf.mxu0
        %v981 = vadd.f32 0.0, %v980
        %982 = vmatmul.f32.gmra.mxu0 %v908
        %v983 = vpop.f32.mrf.mxu0
        %v984 = vadd.f32 0.0, %v983
        %985 = vmatmul.f32.gmra.mxu0 %v911
        %v986 = vpop.f32.mrf.mxu0
        %v987 = vadd.f32 0.0, %v986
        %988 = vmatmul.f32.gmra.mxu0 %v914
        %v989 = vpop.f32.mrf.mxu0
        %v990 = vadd.f32 0.0, %v989
        %991 = vmatmul.f32.gmra.mxu0 %v917
        %v992 = vpop.f32.mrf.mxu0
        %v993 = vadd.f32 0.0, %v992
        %994 = vdwg.mxu0
        %995 = vmatpush.msra.mxu0 0.0
        %996 = vmatpush.msra.mxu0 0.0
        %997 = vmatpush.msra.mxu0 0.0
        %998 = vmatpush.msra.mxu0 0.0
        %999 = vmatpush.msra.mxu0 0.0
        %1000 = vmatpush.msra.mxu0 0.0
        %1001 = vmatpush.msra.mxu0 0.0
        %1002 = vmatpush.msra.mxu0 0.0
        %1003 = vmatpush.msra.mxu0 0.0
        %1004 = vmatpush.msra.mxu0 0.0
        %1005 = vmatpush.msra.mxu0 0.0
        %1006 = vmatpush.msra.mxu0 0.0
        %1007 = vmatpush.msra.mxu0 0.0
        %1008 = vmatpush.msra.mxu0 0.0
        %1009 = vmatpush.msra.mxu0 %v926
        %1010 = vmatpush.msra.mxu0 %v901
        %1011 = vmatmul.f32.gmra.mxu0 %v905
        %v1012 = vpop.f32.mrf.mxu0
        %v1013 = vadd.f32 0.0, %v1012
        %1014 = vmatmul.f32.gmra.mxu0 %v908
        %v1015 = vpop.f32.mrf.mxu0
        %v1016 = vadd.f32 0.0, %v1015
        %1017 = vmatmul.f32.gmra.mxu0 %v911
        %v1018 = vpop.f32.mrf.mxu0
        %v1019 = vadd.f32 0.0, %v1018
        %1020 = vmatmul.f32.gmra.mxu0 %v914
        %v1021 = vpop.f32.mrf.mxu0
        %v1022 = vadd.f32 0.0, %v1021
        %1023 = vmatmul.f32.gmra.mxu0 %v917
        %v1024 = vpop.f32.mrf.mxu0
        %v1025 = vadd.f32 0.0, %v1024
        %1026 = vdwg.mxu0
        %1027 = vmatpush.msra.mxu0 0.0
        %1028 = vmatpush.msra.mxu0 0.0
        %1029 = vmatpush.msra.mxu0 0.0
        %1030 = vmatpush.msra.mxu0 0.0
        %1031 = vmatpush.msra.mxu0 0.0
        %1032 = vmatpush.msra.mxu0 0.0
        %1033 = vmatpush.msra.mxu0 0.0
        %1034 = vmatpush.msra.mxu0 0.0
        %1035 = vmatpush.msra.mxu0 0.0
        %1036 = vmatpush.msra.mxu0 0.0
        %1037 = vmatpush.msra.mxu0 0.0
        %1038 = vmatpush.msra.mxu0 0.0
        %1039 = vmatpush.msra.mxu0 0.0
        %1040 = vmatpush.msra.mxu0 0.0
        %1041 = vmatpush.msra.mxu0 %v929
        %1042 = vmatpush.msra.mxu0 %v902
        %1043 = vmatmul.f32.gmra.mxu0 %v905
        %v1044 = vpop.f32.mrf.mxu0
        %v1045 = vadd.f32 0.0, %v1044
        %1046 = vmatmul.f32.gmra.mxu0 %v908
        %v1047 = vpop.f32.mrf.mxu0
        %v1048 = vadd.f32 0.0, %v1047
        %1049 = vmatmul.f32.gmra.mxu0 %v911
        %v1050 = vpop.f32.mrf.mxu0
        %v1051 = vadd.f32 0.0, %v1050
        %1052 = vmatmul.f32.gmra.mxu0 %v914
        %v1053 = vpop.f32.mrf.mxu0
        %v1054 = vadd.f32 0.0, %v1053
        %1055 = vmatmul.f32.gmra.mxu0 %v917
        %v1056 = vpop.f32.mrf.mxu0
        %v1057 = vadd.f32 0.0, %v1056
        %1058 = vdwg.mxu0
        %1059 = vrot.lane.b32.xlu0 %v949, 16
        %v1060 = vpop.permute.xlu0 %1059
        %1061 = vrot.lane.b32.xlu0 %v981, 16
        %v1062 = vpop.permute.xlu0 %1061
        %1063 = vrot.lane.b32.xlu0 %v1013, 16
        %v1064 = vpop.permute.xlu0 %1063
        %1065 = vrot.lane.b32.xlu0 %v1045, 16
        %v1066 = vpop.permute.xlu0 %1065
        %vm1067 = vcmp.lt.s32.totalorder %v247, 16
        %v1068 = vsel %vm1067, %v1064, %v1066
        %v1069 = vsel %vm1067, %v1062, %v1064
        %v1070 = vsel %vm1067, %v1060, %v1062
        %v1071 = vsel %vm1067, %v1066, %v1060
        %v1072 = vsel %vm355, 1, 0
        %v1073 = vsel %vm356, 1, 0
        %v1074 = vsel %vm357, 1, 0
        %v1075 = vsel %vm358, 1, 0
        %vm1076 = vcmp.eq.s32.totalorder %v1072, 1
        %vm1077 = vcmp.eq.s32.totalorder %v1073, 1
        %vm1078 = vcmp.eq.s32.totalorder %v1074, 1
        %vm1079 = vcmp.eq.s32.totalorder %v1075, 1
        %v1080 = vsel %vm1076, %v1071, 0.0
        %v1081 = vsel %vm1077, %v1070, 0.0
        %v1082 = vsel %vm1078, %v1069, 0.0
        %v1083 = vsel %vm1079, %v1068, 0.0
        %v1084 = vadd.f32 %v1080, 0.0
        %v1085 = vadd.f32 %v1081, 0.0
        %v1086 = vadd.f32 %v1082, 0.0
        %v1087 = vadd.f32 %v1083, 0.0
        %1088 = vrot.lane.b32.xlu0 %v952, 8
        %v1089 = vpop.permute.xlu0 %1088
        %1090 = vrot.lane.b32.xlu0 %v984, 8
        %v1091 = vpop.permute.xlu0 %1090
        %1092 = vrot.lane.b32.xlu0 %v1016, 8
        %v1093 = vpop.permute.xlu0 %1092
        %1094 = vrot.lane.b32.xlu0 %v1048, 8
        %v1095 = vpop.permute.xlu0 %1094
        %vm1096 = vcmp.lt.s32.totalorder %v247, 8
        %v1097 = vsel %vm1096, %v1093, %v1095
        %v1098 = vsel %vm1096, %v1091, %v1093
        %v1099 = vsel %vm1096, %v1089, %v1091
        %v1100 = vsel %vm1096, %v1095, %v1089
        %v1101 = vsel %vm371, 1, 0
        %v1102 = vsel %vm372, 1, 0
        %v1103 = vsel %vm373, 1, 0
        %v1104 = vsel %vm374, 1, 0
        %vm1105 = vcmp.eq.s32.totalorder %v1101, 1
        %vm1106 = vcmp.eq.s32.totalorder %v1102, 1
        %vm1107 = vcmp.eq.s32.totalorder %v1103, 1
        %vm1108 = vcmp.eq.s32.totalorder %v1104, 1
        %v1109 = vsel %vm1105, %v1100, 0.0
        %v1110 = vsel %vm1106, %v1099, 0.0
        %v1111 = vsel %vm1107, %v1098, 0.0
        %v1112 = vsel %vm1108, %v1097, 0.0
        %v1113 = vadd.f32 %v1084, %v1109
        %v1114 = vadd.f32 %v1085, %v1110
        %v1115 = vadd.f32 %v1086, %v1111
        %v1116 = vadd.f32 %v1087, %v1112
        %v1117 = vsel %vm383, 1, 0
        %v1118 = vsel %vm384, 1, 0
        %v1119 = vsel %vm385, 1, 0
        %v1120 = vsel %vm386, 1, 0
        %vm1121 = vcmp.eq.s32.totalorder %v1117, 1
        %vm1122 = vcmp.eq.s32.totalorder %v1118, 1
        %vm1123 = vcmp.eq.s32.totalorder %v1119, 1
        %vm1124 = vcmp.eq.s32.totalorder %v1120, 1
        %v1125 = vsel %vm1121, %v955, 0.0
        %v1126 = vsel %vm1122, %v987, 0.0
        %v1127 = vsel %vm1123, %v1019, 0.0
        %v1128 = vsel %vm1124, %v1051, 0.0
        %v1129 = vadd.f32 %v1113, %v1125
        %v1130 = vadd.f32 %v1114, %v1126
        %v1131 = vadd.f32 %v1115, %v1127
        %v1132 = vadd.f32 %v1116, %v1128
        %1133 = vrot.lane.b32.xlu0 %v958, 120
        %v1134 = vpop.permute.xlu0 %1133
        %1135 = vrot.lane.b32.xlu0 %v990, 120
        %v1136 = vpop.permute.xlu0 %1135
        %1137 = vrot.lane.b32.xlu0 %v1022, 120
        %v1138 = vpop.permute.xlu0 %1137
        %1139 = vrot.lane.b32.xlu0 %v1054, 120
        %v1140 = vpop.permute.xlu0 %1139
        %vm1141 = vcmp.lt.s32.totalorder %v247, 120
        %v1142 = vsel %vm1141, %v1138, %v1140
        %v1143 = vsel %vm1141, %v1136, %v1138
        %v1144 = vsel %vm1141, %v1134, %v1136
        %v1145 = vsel %vm1141, %v1140, %v1134
        %v1146 = vsel %vm399, 1, 0
        %v1147 = vsel %vm400, 1, 0
        %v1148 = vsel %vm401, 1, 0
        %v1149 = vsel %vm402, 1, 0
        %vm1150 = vcmp.eq.s32.totalorder %v1146, 1
        %vm1151 = vcmp.eq.s32.totalorder %v1147, 1
        %vm1152 = vcmp.eq.s32.totalorder %v1148, 1
        %vm1153 = vcmp.eq.s32.totalorder %v1149, 1
        %v1154 = vsel %vm1150, %v1144, 0.0
        %v1155 = vsel %vm1151, %v1143, 0.0
        %v1156 = vsel %vm1152, %v1142, 0.0
        %v1157 = vsel %vm1153, %v1145, 0.0
        %v1158 = vadd.f32 %v1129, %v1154
        %v1159 = vadd.f32 %v1130, %v1155
        %v1160 = vadd.f32 %v1131, %v1156
        %v1161 = vadd.f32 %v1132, %v1157
        %1162 = vrot.lane.b32.xlu0 %v961, 112
        %v1163 = vpop.permute.xlu0 %1162
        %1164 = vrot.lane.b32.xlu0 %v993, 112
        %v1165 = vpop.permute.xlu0 %1164
        %1166 = vrot.lane.b32.xlu0 %v1025, 112
        %v1167 = vpop.permute.xlu0 %1166
        %1168 = vrot.lane.b32.xlu0 %v1057, 112
        %v1169 = vpop.permute.xlu0 %1168
        %vm1170 = vcmp.lt.s32.totalorder %v247, 112
        %v1171 = vsel %vm1170, %v1167, %v1169
        %v1172 = vsel %vm1170, %v1165, %v1167
        %v1173 = vsel %vm1170, %v1163, %v1165
        %v1174 = vsel %vm1170, %v1169, %v1163
        %v1175 = vsel %vm415, 1, 0
        %v1176 = vsel %vm416, 1, 0
        %v1177 = vsel %vm417, 1, 0
        %v1178 = vsel %vm418, 1, 0
        %vm1179 = vcmp.eq.s32.totalorder %v1175, 1
        %vm1180 = vcmp.eq.s32.totalorder %v1176, 1
        %vm1181 = vcmp.eq.s32.totalorder %v1177, 1
        %vm1182 = vcmp.eq.s32.totalorder %v1178, 1
        %v1183 = vsel %vm1179, %v1173, 0.0
        %v1184 = vsel %vm1180, %v1172, 0.0
        %v1185 = vsel %vm1181, %v1171, 0.0
        %v1186 = vsel %vm1182, %v1174, 0.0
        %v1187 = vadd.f32 %v1158, %v1183
        %v1188 = vadd.f32 %v1159, %v1184
        %v1189 = vadd.f32 %v1160, %v1185
        %v1190 = vadd.f32 %v1161, %v1186
        %v1191 = vsel %vm431, %v1190, 0.0
        %v1192 = vsel %vm432, %v1187, 0.0
        %v1193 = vsel %vm433, %v1188, 0.0
        %v1194 = vsel %vm434, %v1189, 0.0
        %v1195 = vadd.f32 %v1191, 0.0
        %v1196 = vadd.f32 %v1192, 0.0
        %v1197 = vadd.f32 %v1193, 0.0
        %v1198 = vadd.f32 %v1194, 0.0
        %v1203 = vrot.slane %v1187, 1
        %v1204 = vrot.slane %v1188, 1
        %v1205 = vrot.slane %v1189, 1
        %v1206 = vrot.slane %v1190, 1
        %1211 = vrot.lane.b32.xlu0 %v1203, 64
        %v1212 = vpop.permute.xlu0 %1211
        %1213 = vrot.lane.b32.xlu0 %v1204, 64
        %v1214 = vpop.permute.xlu0 %1213
        %1215 = vrot.lane.b32.xlu0 %v1205, 64
        %v1216 = vpop.permute.xlu0 %1215
        %1217 = vrot.lane.b32.xlu0 %v1206, 64
        %v1218 = vpop.permute.xlu0 %1217
        %vm1219 = vcmp.lt.s32.totalorder %v247, 64
        %v1220 = vsel %vm1219, %v1216, %v1218
        %v1221 = vsel %vm1219, %v1214, %v1216
        %v1222 = vsel %vm1219, %v1212, %v1214
        %v1223 = vsel %vm1219, %v1218, %v1212
        %v1224 = vsel %vm447, %v1223, 0.0
        %v1225 = vsel %vm448, %v1222, 0.0
        %v1226 = vsel %vm449, %v1221, 0.0
        %v1227 = vsel %vm450, %v1220, 0.0
        %v1228 = vadd.f32 %v1195, %v1224
        %v1229 = vadd.f32 %v1196, %v1225
        %v1230 = vadd.f32 %v1197, %v1226
        %v1231 = vadd.f32 %v1198, %v1227
        %v1232 = vsel %vm459, %v1187, 0.0
        %v1233 = vsel %vm460, %v1188, 0.0
        %v1234 = vsel %vm461, %v1189, 0.0
        %v1235 = vsel %vm462, %v1190, 0.0
        %v1240 = vrot.slane %v1232, 2
        %v1241 = vrot.slane %v1233, 2
        %v1242 = vrot.slane %v1234, 2
        %v1243 = vrot.slane %v1235, 2
        %v1248 = vadd.f32 %v1228, %v1240
        %v1249 = vadd.f32 %v1229, %v1241
        %v1250 = vadd.f32 %v1230, %v1242
        %v1251 = vadd.f32 %v1231, %v1243
        %v1252 = vrot.slane %v1187, 3
        %v1253 = vrot.slane %v1188, 3
        %v1254 = vrot.slane %v1189, 3
        %v1255 = vrot.slane %v1190, 3
        %1260 = vrot.lane.b32.xlu0 %v1252, 64
        %v1261 = vpop.permute.xlu0 %1260
        %1262 = vrot.lane.b32.xlu0 %v1253, 64
        %v1263 = vpop.permute.xlu0 %1262
        %1264 = vrot.lane.b32.xlu0 %v1254, 64
        %v1265 = vpop.permute.xlu0 %1264
        %1266 = vrot.lane.b32.xlu0 %v1255, 64
        %v1267 = vpop.permute.xlu0 %1266
        %v1268 = vsel %vm1219, %v1265, %v1267
        %v1269 = vsel %vm1219, %v1263, %v1265
        %v1270 = vsel %vm1219, %v1261, %v1263
        %v1271 = vsel %vm1219, %v1267, %v1261
        %v1272 = vsel %vm475, %v1270, 0.0
        %v1273 = vsel %vm476, %v1269, 0.0
        %v1274 = vsel %vm477, %v1268, 0.0
        %v1275 = vsel %vm478, %v1271, 0.0
        %v1276 = vadd.f32 %v1248, %v1272
        %v1277 = vadd.f32 %v1249, %v1273
        %v1278 = vadd.f32 %v1250, %v1274
        %v1279 = vadd.f32 %v1251, %v1275
        %v1280 = vrot.slane %v1187, 4
        %v1281 = vrot.slane %v1188, 4
        %v1282 = vrot.slane %v1189, 4
        %v1283 = vrot.slane %v1190, 4
        %v1288 = vsel %vm491, %v1281, 0.0
        %v1289 = vsel %vm492, %v1282, 0.0
        %v1290 = vsel %vm493, %v1283, 0.0
        %v1291 = vsel %vm494, %v1280, 0.0
        %v1292 = vadd.f32 %v1276, %v1288
        %v1293 = vadd.f32 %v1277, %v1289
        %v1294 = vadd.f32 %v1278, %v1290
        %v1295 = vadd.f32 %v1279, %v1291
        %v1296 = vstv %s503
        %v1297 = vadd.f32 %v1292, %v1296
        %v1298 = vadd.f32 %v1293, %v1296
        %v1299 = vadd.f32 %v1294, %v1296
        %v1300 = vadd.f32 %v1295, %v1296
        %v1301 = vxor.u32 %v1297, 2147483648
        %v1302 = vxor.u32 %v1298, 2147483648
        %v1303 = vxor.u32 %v1299, 2147483648
        %v1304 = vxor.u32 %v1300, 2147483648
        %v1305 = vmul.f32 %v1301, 1.442695
        %v1306 = vpow.pop %v1305
        %v1307 = vmul.f32 %v1302, 1.442695
        %v1308 = vpow.pop %v1307
        %v1309 = vmul.f32 %v1303, 1.442695
        %v1310 = vpow.pop %v1309
        %v1311 = vmul.f32 %v1304, 1.442695
        %v1312 = vpow.pop %v1311
        %v1313 = vadd.f32 %v1306, 1.0
        %v1314 = vadd.f32 %v1308, 1.0
        %v1315 = vadd.f32 %v1310, 1.0
        %v1316 = vadd.f32 %v1312, 1.0
        %v1317 = vrcp.pop %v1313
        %v1318 = vmul.f32 %v1313, %v1317
        %v1319 = vsub.f32 1.0, %v1318
        %v1320 = vmul.f32 %v1317, %v1319
        %v1321 = vadd.f32 %v1317, %v1320
        %vm1322 = vweird.f32 %v1313
        %vm1323 = vweird.f32 %v1317
        %vm1324 = vmor %vm1322, %vm1323
        %v1325 = vsel %vm1324, %v1317, %v1321
        %v1326 = vand.u32 2147483647, %v1313
        %vm1327 = vcmp.eq.f32.partialorder %v1326, 8.507059e+37
        %v1328 = vand.u32 %v1313, 2147483648
        %v1329 = vor.u32 1.1754944e-38, %v1328
        %v1330 = vsel %vm1327, %v1329, %v1325
        %v1331 = vmul.f32 1.0, %v1330
        %v1332 = vrcp.pop %v1314
        %v1333 = vmul.f32 %v1314, %v1332
        %v1334 = vsub.f32 1.0, %v1333
        %v1335 = vmul.f32 %v1332, %v1334
        %v1336 = vadd.f32 %v1332, %v1335
        %vm1337 = vweird.f32 %v1314
        %vm1338 = vweird.f32 %v1332
        %vm1339 = vmor %vm1337, %vm1338
        %v1340 = vsel %vm1339, %v1332, %v1336
        %v1341 = vand.u32 2147483647, %v1314
        %vm1342 = vcmp.eq.f32.partialorder %v1341, 8.507059e+37
        %v1343 = vand.u32 %v1314, 2147483648
        %v1344 = vor.u32 1.1754944e-38, %v1343
        %v1345 = vsel %vm1342, %v1344, %v1340
        %v1346 = vmul.f32 1.0, %v1345
        %v1347 = vrcp.pop %v1315
        %v1348 = vmul.f32 %v1315, %v1347
        %v1349 = vsub.f32 1.0, %v1348
        %v1350 = vmul.f32 %v1347, %v1349
        %v1351 = vadd.f32 %v1347, %v1350
        %vm1352 = vweird.f32 %v1315
        %vm1353 = vweird.f32 %v1347
        %vm1354 = vmor %vm1352, %vm1353
        %v1355 = vsel %vm1354, %v1347, %v1351
        %v1356 = vand.u32 2147483647, %v1315
        %vm1357 = vcmp.eq.f32.partialorder %v1356, 8.507059e+37
        %v1358 = vand.u32 %v1315, 2147483648
        %v1359 = vor.u32 1.1754944e-38, %v1358
        %v1360 = vsel %vm1357, %v1359, %v1355
        %v1361 = vmul.f32 1.0, %v1360
        %v1362 = vrcp.pop %v1316
        %v1363 = vmul.f32 %v1316, %v1362
        %v1364 = vsub.f32 1.0, %v1363
        %v1365 = vmul.f32 %v1362, %v1364
        %v1366 = vadd.f32 %v1362, %v1365
        %vm1367 = vweird.f32 %v1316
        %vm1368 = vweird.f32 %v1362
        %vm1369 = vmor %vm1367, %vm1368
        %v1370 = vsel %vm1369, %v1362, %v1366
        %v1371 = vand.u32 2147483647, %v1316
        %vm1372 = vcmp.eq.f32.partialorder %v1371, 8.507059e+37
        %v1373 = vand.u32 %v1316, 2147483648
        %v1374 = vor.u32 1.1754944e-38, %v1373
        %v1375 = vsel %vm1372, %v1374, %v1370
        %v1376 = vmul.f32 1.0, %v1375
        %v1377 = vperm.slane %v1331, 0
        %v1378 = vperm.slane %v1346, 0
        %v1379 = vperm.slane %v1361, 0
        %v1380 = vperm.slane %v1376, 0
        %v1381 = vmul.f32 %v661, %v1377
        %v1382 = vmul.f32 %v662, %v1378
        %v1383 = vmul.f32 %v663, %v1379
        %v1384 = vmul.f32 %v664, %v1380
        %v1385 = vmul.f32 %v665, %v1377
        %v1386 = vmul.f32 %v666, %v1378
        %v1387 = vmul.f32 %v667, %v1379
        %v1388 = vmul.f32 %v668, %v1380
        %1389 = vst [vmem:[%s245] sm:$0xff] %v1381
        %1390 = vst [vmem:[%s245 + $0x8] sm:$0xff] %v1382
        %1391 = vst [vmem:[%s245 + $0x10] sm:$0xff] %v1383
        %1392 = vst [vmem:[%s245 + $0x18] sm:$0xff] %v1384
        %1393 = vst [vmem:[%s245 + $0x20] sm:$0xff] %v1385
        %1394 = vst [vmem:[%s245 + $0x28] sm:$0xff] %v1386
        %1395 = vst [vmem:[%s245 + $0x30] sm:$0xff] %v1387
        %1396 = vst [vmem:[%s245 + $0x38] sm:$0xff] %v1388
        %s1397 = sand.u32 %s141, 1
        %s1398 = scalar_lea.sflag [#allocation5], %s1397
        %s1399 = sand.u32 %s141, 1
        %s1400 = smul.addr %s1399, 64
        %s1401 = scalar_lea.vmem [#allocation6], %s1400
        // Predicated region
        $region45: #{tpu_custom_call.1} parent=39 // pred_check
          %p1402 = pneg %p151
        $region46: #{tpu_custom_call.1} parent=39 // pred_check_branch
          %1404 = sbr.rel (%p1402) target = $region48
        $region47: #{tpu_custom_call.1} parent=39 // pred_region
          %1406 = vsyncadd %s1398, 0
          %s1407 = smul.addr %s23, 8
          %s1408 = smul.addr %s1407, 8
          %s1409 = scalar_lea.hbm %s5, %s1408
          %s1410 = sshll.u32 %s1401, 4
          %s1411 = int_to_ptr.vmem [resolvable:$true] %s1410
          %s1412 = sshll.u32 %s1409, 4
          %s1413 = int_to_ptr.hbm [resolvable:$true] %s1412
          %1418 = dma.vmem_to_hbm [thread:$0]  %s1411, 1024, %s1413, %s1398, 512, 512, 32
        $region48: #{tpu_custom_call.1} parent=39 // pred_fallthru
          _
      $region40: #{tpu_custom_call.1} parent=5 // pred_fallthru
        _
      %p1419 = scmp.le.s32.totalorder 2, %s18
      // Predicated region
      $region49: #{tpu_custom_call.1} parent=5 // pred_check
        %p1420 = pneg %p1419
      $region50: #{tpu_custom_call.1} parent=5 // pred_check_branch
        %1422 = sbr.rel (%p1420) target = $region52
      $region51: #{tpu_custom_call.1} parent=5 // pred_region
        %s1423 = ssub.s32 %s18, 2
        // Predicated region
        $region53: #{tpu_custom_call.1} parent=51 // pred_check
          %p1424 = pneg %p157
        $region54: #{tpu_custom_call.1} parent=51 // pred_check_branch
          %1426 = sbr.rel (%p1424) target = $region56
        $region55: #{tpu_custom_call.1} parent=51 // pred_region
          %s1427 = sand.u32 %s142, 1
          %s1428 = scalar_lea.sflag [#allocation5], %s1427
          %s1429 = sand.u32 %s142, 1
          %s1430 = smul.addr %s1429, 64
          %s1431 = scalar_lea.vmem [#allocation6], %s1430
          %1433 = dma.done %s1428, 1024
        $region56: #{tpu_custom_call.1} parent=51 // pred_fallthru
          _
      $region52: #{tpu_custom_call.1} parent=5 // pred_fallthru
        _
    $region6: #{tpu_custom_call.1} parent=1 // loop_footer
      %s22 = sadd.s32 1, %s18
    $region7: #{tpu_custom_call.1} parent=1 // loop_footer_branch
      %17 = sbr.rel target = $region3
    $region8: #{tpu_custom_call.1} parent=1 // loop_exit
      _
    %1434 = vsyncpa [#allocation4], 1
    %s1435 = scalar_lea.sflag [#allocation4], 1
    %1436 = vsyncpa %s1435, 1
    %1437 = vsyncpa [#allocation5], 1
    %s1438 = scalar_lea.sflag [#allocation5], 1
    %1439 = vsyncpa %s1438, 1

</llo_original>
